<compile_context>
chip_gen: v5e
topology: v5e:2x2
jax: 0.10.0
libtpu: 0.0.40
codegen_flags: <defaults>
</compile_context>

<pallas_src>
import jax
import jax.numpy as jnp
from jax.experimental import pallas as pl
from jax.experimental.pallas import tpu as pltpu

# ----------------------------- config ---------------------------------------
VOCAB = 128
MAX_POS = 64
DIM = 128            # hidden size (real DistilBERT: 768)
N_HEADS = 4
HEAD_DIM = DIM // N_HEADS
FFN_DIM = 256
N_LAYERS = 2
NUM_LABELS = 4       # len(IEMOCAP_TAGS)
LN_EPS = 1e-12


# ----------------------------- kernel helpers --------------------------------
def _layernorm(x, g, b):
    mean = jnp.mean(x, axis=-1, keepdims=True)
    var = jnp.mean(jnp.square(x - mean), axis=-1, keepdims=True)
    return (x - mean) * jax.lax.rsqrt(var + LN_EPS) * g + b


# ----------------------------- fused forward kernel --------------------------
def _fused_forward_kernel(
    # inputs
    h_emb_ref, bias_ref, emb_g_ref, emb_b_ref,
    wqkv_ref, bqkv_ref, wo_ref, bo_ref, sa_g_ref, sa_b_ref,
    w1_ref, b1_ref, w2_ref, b2_ref, out_g_ref, out_b_ref,
    pre_w_ref, pre_b_ref, cls_w_ref, cls_b_ref, labels_ref,
    # outputs
    logits_ref, loss_ref,
    # scratch
    h_scratch, ctx_scratch,
):
    lyr = pl.program_id(1)
    S = h_emb_ref.shape[0]
    scale = 1.0 / (HEAD_DIM ** 0.5)

    # Layer 0: embedding layer-norm seeds the VMEM-resident hidden state for
    # this batch row.
    @pl.when(lyr == 0)
    def _():
        h_scratch[...] = _layernorm(h_emb_ref[...].astype(jnp.float32),
                                    emb_g_ref[...], emb_b_ref[...])

    h = h_scratch[...]                                    # (S, D) f32, resident
    bias = bias_ref[...]                                  # (1, S) additive key mask

    # --- fused QKV projection: one MXU pass, bf16 in / f32 accumulate ---
    qkv = jnp.dot(h.astype(jnp.bfloat16), wqkv_ref[...],
                  preferred_element_type=jnp.float32) + bqkv_ref[...]
    # Fold 1/sqrt(Dh) into q; drop all attention operands to bf16 so every MXU
    # op in the kernel is bf16 x bf16 with f32 accumulation.
    q = (qkv[:, 0 * DIM:1 * DIM] * scale).astype(jnp.bfloat16)
    k = qkv[:, 1 * DIM:2 * DIM].astype(jnp.bfloat16)
    v = qkv[:, 2 * DIM:3 * DIM].astype(jnp.bfloat16)

    # --- attention: heads are static lane slices of the (S, 128) slab; each
    # head's context is written lane-dense into the ctx scratch (no concats).
    for hh in range(N_HEADS):
        lanes = slice(hh * HEAD_DIM, (hh + 1) * HEAD_DIM)
        scores = jax.lax.dot_general(                     # (S, S), no k transpose
            q[:, lanes], k[:, lanes],
            dimension_numbers=(((1,), (1,)), ((), ())),
            preferred_element_type=jnp.float32)
        scores = scores + bias
        scores = scores - jnp.max(scores, axis=-1, keepdims=True)
        p = jnp.exp(scores)
        p = p * pl.reciprocal(jnp.sum(p, axis=-1, keepdims=True), approx=True)
        ctx_scratch[:, lanes] = jnp.dot(p.astype(jnp.bfloat16), v[:, lanes],
                                        preferred_element_type=jnp.float32)
    ctx = ctx_scratch[...]                                # (S, D) lane-dense

    attn_out = jnp.dot(ctx.astype(jnp.bfloat16), wo_ref[...],
                       preferred_element_type=jnp.float32) + bo_ref[...]
    h = _layernorm(h + attn_out, sa_g_ref[...], sa_b_ref[...])

    # --- feed-forward ---
    ffn = jnp.dot(h.astype(jnp.bfloat16), w1_ref[...],
                  preferred_element_type=jnp.float32) + b1_ref[...]
    # TODO(synk): HF DistilBERT uses exact erf GELU; tanh approximation kept for
    # a clean EUP lowering (small numeric divergence from the PyTorch reference).
    ffn = jax.nn.gelu(ffn, approximate=True)
    ffn = jnp.dot(ffn.astype(jnp.bfloat16), w2_ref[...],
                  preferred_element_type=jnp.float32) + b2_ref[...]
    h = _layernorm(h + ffn, out_g_ref[...], out_b_ref[...])
    h_scratch[...] = h

    # Last layer: classifier head + per-batch BCE partial loss fused in the tail.
    @pl.when(lyr == pl.num_programs(1) - 1)
    def _():
        pooled = h[0:1, :]                                # CLS row, (1, D)
        pooled = jnp.dot(pooled.astype(jnp.bfloat16), pre_w_ref[...],
                         preferred_element_type=jnp.float32) + pre_b_ref[...]
        pooled = jnp.maximum(pooled, 0.0)                 # ReLU; dropout = identity
        logits = jnp.dot(pooled.astype(jnp.bfloat16), cls_w_ref[...],
                         preferred_element_type=jnp.float32) + cls_b_ref[...]
        logits_ref[...] = logits.astype(logits_ref.dtype)
        y = labels_ref[...].astype(jnp.float32)
        # BCEWithLogitsLoss elementwise: max(x,0) - x*y + log1p(exp(-|x|))
        per_elem = (jnp.maximum(logits, 0.0) - logits * y
                    + jnp.log1p(jnp.exp(-jnp.abs(logits))))
        loss_ref[...] = jnp.sum(per_elem).reshape(1, 1)   # per-batch partial sum


# ----------------------------- wrapper ---------------------------------------
def text_model_forward(params, token, mask, labels):
    """TextModel.forward(token, mask, labels) -> (logits, loss)."""
    B, S = token.shape

    # Embedding gather + positional add in plain JAX (no clean Pallas gather).
    h_emb = (params["word_emb"][token]
             + params["pos_emb"][jnp.arange(S)][None, :, :])        # (B, S, D)
    # Additive attention bias from the padding mask: 0 keep, -1e9 masked key.
    bias = ((mask.astype(jnp.float32) - 1.0) * 1e9).reshape(B, 1, S)
    labels3 = labels.astype(jnp.float32).reshape(B, 1, NUM_LABELS)

    per_batch = lambda b, l: (b, 0, 0)
    per_layer = lambda b, l: (l, 0, 0)
    const2 = lambda b, l: (0, 0)

    in_specs = [
        pl.BlockSpec((None, S, DIM), per_batch),          # h_emb       -> (S, D)
        pl.BlockSpec((None, 1, S), per_batch),            # bias        -> (1, S)
        pl.BlockSpec((1, DIM), const2),                   # emb_ln_g
        pl.BlockSpec((1, DIM), const2),                   # emb_ln_b
        pl.BlockSpec((None, DIM, 3 * DIM), per_layer),    # wqkv
        pl.BlockSpec((None, 1, 3 * DIM), per_layer),      # bqkv
        pl.BlockSpec((None, DIM, DIM), per_layer),        # wo
        pl.BlockSpec((None, 1, DIM), per_layer),          # bo
        pl.BlockSpec((None, 1, DIM), per_layer),          # sa_ln_g
        pl.BlockSpec((None, 1, DIM), per_layer),          # sa_ln_b
        pl.BlockSpec((None, DIM, FFN_DIM), per_layer),    # w1
        pl.BlockSpec((None, 1, FFN_DIM), per_layer),      # b1
        pl.BlockSpec((None, FFN_DIM, DIM), per_layer),    # w2
        pl.BlockSpec((None, 1, DIM), per_layer),          # b2
        pl.BlockSpec((None, 1, DIM), per_layer),          # out_ln_g
        pl.BlockSpec((None, 1, DIM), per_layer),          # out_ln_b
        pl.BlockSpec((DIM, DIM), const2),                 # pre_w
        pl.BlockSpec((1, DIM), const2),                   # pre_b
        pl.BlockSpec((DIM, NUM_LABELS), const2),          # cls_w
        pl.BlockSpec((1, NUM_LABELS), const2),            # cls_b
        pl.BlockSpec((None, 1, NUM_LABELS), per_batch),   # labels      -> (1, L)
    ]
    out_specs = [
        pl.BlockSpec((None, 1, NUM_LABELS), per_batch),   # logits      -> (1, L)
        pl.BlockSpec((None, 1, 1), per_batch),            # per-batch loss partial
    ]
    out_shape = [
        jax.ShapeDtypeStruct((B, 1, NUM_LABELS), jnp.float32),
        jax.ShapeDtypeStruct((B, 1, 1), jnp.float32),
    ]

    logits, loss_part = pl.pallas_call(
        _fused_forward_kernel,
        grid=(B, N_LAYERS),
        in_specs=in_specs,
        out_specs=out_specs,
        out_shape=out_shape,
        scratch_shapes=[pltpu.VMEM((S, DIM), jnp.float32),    # hidden-state carry
                        pltpu.VMEM((S, DIM), jnp.float32)],   # lane-dense ctx slab
        compiler_params=pltpu.CompilerParams(
            # batch rows independent (2nd TC on v7x); layer axis sequential.
            dimension_semantics=("parallel", "arbitrary")),
    )(h_emb, bias, params["emb_ln_g"], params["emb_ln_b"],
      params["wqkv"], params["bqkv"], params["wo"], params["bo"],
      params["sa_ln_g"], params["sa_ln_b"],
      params["w1"], params["b1"], params["w2"], params["b2"],
      params["out_ln_g"], params["out_ln_b"],
      params["pre_w"], params["pre_b"], params["cls_w"], params["cls_b"],
      labels3)

    logits = logits.reshape(B, NUM_LABELS)
    loss = jnp.sum(loss_part) / (B * NUM_LABELS)          # BCE mean reduction
    return logits, loss


# ----------------------------- params ----------------------------------------
def init_params(key):
    ks = jax.random.split(key, 8)

    def rnd(k, shape):
        return jax.random.normal(k, shape, jnp.float32) * 0.02

    return {
        # embeddings (plain-JAX gather) stay f32
        "word_emb": rnd(ks[0], (VOCAB, DIM)),
        "pos_emb": rnd(ks[1], (MAX_POS, DIM)),
        "emb_ln_g": jnp.ones((1, DIM), jnp.float32),
        "emb_ln_b": jnp.zeros((1, DIM), jnp.float32),
        # per-layer weights stacked on a leading (N_LAYERS,) axis; matmul
        # weights in bf16 (MXU-native), biases / LN params in f32.
        "wqkv": rnd(ks[2], (N_LAYERS, DIM, 3 * DIM)).astype(jnp.bfloat16),
        "bqkv": jnp.zeros((N_LAYERS, 1, 3 * DIM), jnp.float32),
        "wo": rnd(ks[3], (N_LAYERS, DIM, DIM)).astype(jnp.bfloat16),
        "bo": jnp.zeros((N_LAYERS, 1, DIM), jnp.float32),
        "sa_ln_g": jnp.ones((N_LAYERS, 1, DIM), jnp.float32),
        "sa_ln_b": jnp.zeros((N_LAYERS, 1, DIM), jnp.float32),
        "w1": rnd(ks[4], (N_LAYERS, DIM, FFN_DIM)).astype(jnp.bfloat16),
        "b1": jnp.zeros((N_LAYERS, 1, FFN_DIM), jnp.float32),
        "w2": rnd(ks[5], (N_LAYERS, FFN_DIM, DIM)).astype(jnp.bfloat16),
        "b2": jnp.zeros((N_LAYERS, 1, DIM), jnp.float32),
        "out_ln_g": jnp.ones((N_LAYERS, 1, DIM), jnp.float32),
        "out_ln_b": jnp.zeros((N_LAYERS, 1, DIM), jnp.float32),
        # classifier head
        "pre_w": rnd(ks[6], (DIM, DIM)).astype(jnp.bfloat16),
        "pre_b": jnp.zeros((1, DIM), jnp.float32),
        "cls_w": rnd(ks[7], (DIM, NUM_LABELS)).astype(jnp.bfloat16),
        "cls_b": jnp.zeros((1, NUM_LABELS), jnp.float32),
    }


if __name__ == "__main__":
    key = jax.random.PRNGKey(0)
    pkey, tkey, lkey = jax.random.split(key, 3)
    params = init_params(pkey)

    B, S = 2, 16
    token = jax.random.randint(tkey, (B, S), 0, VOCAB, dtype=jnp.int32)
    mask = jnp.ones((B, S), dtype=jnp.int32).at[1, 12:].set(0)   # pad tail of seq 1
    labels = (jax.random.uniform(lkey, (B, NUM_LABELS)) > 0.5).astype(jnp.float32)

    logits, loss = jax.jit(text_model_forward)(params, token, mask, labels)
    jax.block_until_ready((logits, loss))
    assert logits.shape == (B, NUM_LABELS)
    assert loss.shape == ()
    assert bool(jnp.all(jnp.isfinite(logits))) and bool(jnp.isfinite(loss))
    print("KERNEL_OK")
</pallas_src>

<mosaic_0001>
module attributes {stable_mosaic.version = 11 : i64} {
  func.func @_fused_forward_kernel(%arg0: i32, %arg1: i32, %arg2: memref<1x16x128xf32, #tpu.memory_space<vmem>>, %arg3: memref<1x1x16xf32, #tpu.memory_space<vmem>>, %arg4: memref<1x128xf32, #tpu.memory_space<vmem>>, %arg5: memref<1x128xf32, #tpu.memory_space<vmem>>, %arg6: memref<1x128x384xbf16, #tpu.memory_space<vmem>>, %arg7: memref<1x1x384xf32, #tpu.memory_space<vmem>>, %arg8: memref<1x128x128xbf16, #tpu.memory_space<vmem>>, %arg9: memref<1x1x128xf32, #tpu.memory_space<vmem>>, %arg10: memref<1x1x128xf32, #tpu.memory_space<vmem>>, %arg11: memref<1x1x128xf32, #tpu.memory_space<vmem>>, %arg12: memref<1x128x256xbf16, #tpu.memory_space<vmem>>, %arg13: memref<1x1x256xf32, #tpu.memory_space<vmem>>, %arg14: memref<1x256x128xbf16, #tpu.memory_space<vmem>>, %arg15: memref<1x1x128xf32, #tpu.memory_space<vmem>>, %arg16: memref<1x1x128xf32, #tpu.memory_space<vmem>>, %arg17: memref<1x1x128xf32, #tpu.memory_space<vmem>>, %arg18: memref<128x128xbf16, #tpu.memory_space<vmem>>, %arg19: memref<1x128xf32, #tpu.memory_space<vmem>>, %arg20: memref<128x4xbf16, #tpu.memory_space<vmem>>, %arg21: memref<1x4xf32, #tpu.memory_space<vmem>>, %arg22: memref<1x1x4xf32, #tpu.memory_space<vmem>>, %arg23: memref<1x1x4xf32, #tpu.memory_space<vmem>>, %arg24: memref<1x1x1xf32, #tpu.memory_space<vmem>>, %arg25: memref<16x128xf32, #tpu.memory_space<vmem>>, %arg26: memref<16x128xf32, #tpu.memory_space<vmem>>) attributes {dimension_semantics = [#tpu.dimension_semantics<parallel>, #tpu.dimension_semantics<arbitrary>], iteration_bounds = array<i64: 2, 2>, scalar_prefetch = 0 : i64, scratch_operands = 2 : i64, tpu.core_type = #tpu.core_type<tc>, window_params = [{transform_indices = @transform_0, window_bounds = array<i64: 1, 16, 128>}, {transform_indices = @transform_1, window_bounds = array<i64: 1, 1, 16>}, {pipeline_mode = #tpu.pipeline_mode<synchronous>, transform_indices = @transform_2, window_bounds = array<i64: 1, 128>}, {pipeline_mode = #tpu.pipeline_mode<synchronous>, transform_indices = @transform_3, window_bounds = array<i64: 1, 128>}, {transform_indices = @transform_4, window_bounds = array<i64: 1, 128, 384>}, {transform_indices = @transform_5, window_bounds = array<i64: 1, 1, 384>}, {transform_indices = @transform_6, window_bounds = array<i64: 1, 128, 128>}, {transform_indices = @transform_7, window_bounds = array<i64: 1, 1, 128>}, {transform_indices = @transform_8, window_bounds = array<i64: 1, 1, 128>}, {transform_indices = @transform_9, window_bounds = array<i64: 1, 1, 128>}, {transform_indices = @transform_10, window_bounds = array<i64: 1, 128, 256>}, {transform_indices = @transform_11, window_bounds = array<i64: 1, 1, 256>}, {transform_indices = @transform_12, window_bounds = array<i64: 1, 256, 128>}, {transform_indices = @transform_13, window_bounds = array<i64: 1, 1, 128>}, {transform_indices = @transform_14, window_bounds = array<i64: 1, 1, 128>}, {transform_indices = @transform_15, window_bounds = array<i64: 1, 1, 128>}, {pipeline_mode = #tpu.pipeline_mode<synchronous>, transform_indices = @transform_16, window_bounds = array<i64: 128, 128>}, {pipeline_mode = #tpu.pipeline_mode<synchronous>, transform_indices = @transform_17, window_bounds = array<i64: 1, 128>}, {pipeline_mode = #tpu.pipeline_mode<synchronous>, transform_indices = @transform_18, window_bounds = array<i64: 128, 4>}, {pipeline_mode = #tpu.pipeline_mode<synchronous>, transform_indices = @transform_19, window_bounds = array<i64: 1, 4>}, {transform_indices = @transform_20, window_bounds = array<i64: 1, 1, 4>}, {transform_indices = @transform_21, window_bounds = array<i64: 1, 1, 4>}, {transform_indices = @transform_22, window_bounds = array<i64: 1, 1, 1>}]} {
    %c0_i32 = arith.constant 0 : i32
    %0 = arith.cmpi eq, %arg1, %c0_i32 : i32
    %1 = arith.extui %0 : i1 to i32
    %c0_i32_0 = arith.constant 0 : i32
    %2 = arith.cmpi ne, %1, %c0_i32_0 : i32
    scf.if %2 {
      %c0_85 = arith.constant 0 : index
      %c0_86 = arith.constant 0 : index
      %c0_87 = arith.constant 0 : index
      %194 = vector.load %arg2[%c0_85, %c0_86, %c0_87] : memref<1x16x128xf32, #tpu.memory_space<vmem>>, vector<1x16x128xf32>
      %195 = vector.shape_cast %194 : vector<1x16x128xf32> to vector<16x128xf32>
      %c0_88 = arith.constant 0 : index
      %c0_89 = arith.constant 0 : index
      %196 = vector.load %arg4[%c0_88, %c0_89] : memref<1x128xf32, #tpu.memory_space<vmem>>, vector<1x128xf32>
      %c0_90 = arith.constant 0 : index
      %c0_91 = arith.constant 0 : index
      %197 = vector.load %arg5[%c0_90, %c0_91] : memref<1x128xf32, #tpu.memory_space<vmem>>, vector<1x128xf32>
      %cst_92 = arith.constant dense<0.000000e+00> : vector<16xf32>
      %198 = vector.multi_reduction <add>, %195, %cst_92 [1] : vector<16x128xf32> to vector<16xf32>
      %199 = vector.shape_cast %198 : vector<16xf32> to vector<16x1xf32>
      %cst_93 = arith.constant 1.280000e+02 : f32
      %200 = vector.broadcast %cst_93 : f32 to vector<16x1xf32>
      %201 = arith.divf %199, %200 : vector<16x1xf32>
      %202 = vector.broadcast %201 : vector<16x1xf32> to vector<16x128xf32>
      %203 = arith.subf %195, %202 : vector<16x128xf32>
      %204 = arith.mulf %203, %203 : vector<16x128xf32>
      %cst_94 = arith.constant dense<0.000000e+00> : vector<16xf32>
      %205 = vector.multi_reduction <add>, %204, %cst_94 [1] : vector<16x128xf32> to vector<16xf32>
      %206 = vector.shape_cast %205 : vector<16xf32> to vector<16x1xf32>
      %cst_95 = arith.constant 1.280000e+02 : f32
      %207 = vector.broadcast %cst_95 : f32 to vector<16x1xf32>
      %208 = arith.divf %206, %207 : vector<16x1xf32>
      %209 = vector.broadcast %201 : vector<16x1xf32> to vector<16x128xf32>
      %210 = arith.subf %195, %209 : vector<16x128xf32>
      %cst_96 = arith.constant 9.99999996E-13 : f32
      %211 = vector.broadcast %cst_96 : f32 to vector<16x1xf32>
      %212 = arith.addf %208, %211 : vector<16x1xf32>
      %213 = math.rsqrt %212 : vector<16x1xf32>
      %214 = vector.broadcast %213 : vector<16x1xf32> to vector<16x128xf32>
      %215 = arith.mulf %210, %214 : vector<16x128xf32>
      %216 = vector.broadcast %196 : vector<1x128xf32> to vector<16x128xf32>
      %217 = arith.mulf %215, %216 : vector<16x128xf32>
      %218 = vector.broadcast %197 : vector<1x128xf32> to vector<16x128xf32>
      %219 = arith.addf %217, %218 : vector<16x128xf32>
      %c0_97 = arith.constant 0 : index
      %c0_98 = arith.constant 0 : index
      %220 = vector.load %arg25[%c0_97, %c0_98] : memref<16x128xf32, #tpu.memory_space<vmem>>, vector<16x128xf32>
      tpu.vector_store %arg25[%c0_97, %c0_98], %219 {strides = array<i32>} : memref<16x128xf32, #tpu.memory_space<vmem>>, vector<16x128xf32>,
    } else {
    }
    %c0 = arith.constant 0 : index
    %c0_1 = arith.constant 0 : index
    %3 = vector.load %arg25[%c0, %c0_1] : memref<16x128xf32, #tpu.memory_space<vmem>>, vector<16x128xf32>
    %c0_2 = arith.constant 0 : index
    %c0_3 = arith.constant 0 : index
    %c0_4 = arith.constant 0 : index
    %4 = vector.load %arg3[%c0_2, %c0_3, %c0_4] : memref<1x1x16xf32, #tpu.memory_space<vmem>>, vector<1x1x16xf32>
    %5 = vector.shape_cast %4 : vector<1x1x16xf32> to vector<1x16xf32>
    %6 = arith.truncf %3 : vector<16x128xf32> to vector<16x128xbf16>
    %c0_5 = arith.constant 0 : index
    %c0_6 = arith.constant 0 : index
    %c0_7 = arith.constant 0 : index
    %7 = vector.load %arg6[%c0_5, %c0_6, %c0_7] : memref<1x128x384xbf16, #tpu.memory_space<vmem>>, vector<1x128x384xbf16>
    %8 = vector.shape_cast %7 : vector<1x128x384xbf16> to vector<128x384xbf16>
    %cst = arith.constant dense<0.000000e+00> : vector<16x384xf32>
    %9 = tpu.matmul %6, %8, %cst {dimension_numbers = #tpu.dot_dimension_numbers<[1], [0], [0], [1], [0, 0, 1, 1], [], []>} : vector<16x128xbf16>, vector<128x384xbf16>, vector<16x384xf32> -> vector<16x384xf32>
    %c0_8 = arith.constant 0 : index
    %c0_9 = arith.constant 0 : index
    %c0_10 = arith.constant 0 : index
    %10 = vector.load %arg7[%c0_8, %c0_9, %c0_10] : memref<1x1x384xf32, #tpu.memory_space<vmem>>, vector<1x1x384xf32>
    %11 = vector.shape_cast %10 : vector<1x1x384xf32> to vector<1x384xf32>
    %12 = vector.broadcast %11 : vector<1x384xf32> to vector<16x384xf32>
    %13 = arith.addf %9, %12 : vector<16x384xf32>
    %14 = vector.extract_strided_slice %13 {offsets = [0, 0], sizes = [16, 128], strides = [1, 1]} : vector<16x384xf32> to vector<16x128xf32>
    %cst_11 = arith.constant 0.176776692 : f32
    %15 = vector.broadcast %cst_11 : f32 to vector<16x128xf32>
    %16 = arith.mulf %14, %15 : vector<16x128xf32>
    %17 = arith.truncf %16 : vector<16x128xf32> to vector<16x128xbf16>
    %18 = vector.extract_strided_slice %13 {offsets = [0, 128], sizes = [16, 128], strides = [1, 1]} : vector<16x384xf32> to vector<16x128xf32>
    %19 = arith.truncf %18 : vector<16x128xf32> to vector<16x128xbf16>
    %20 = vector.extract_strided_slice %13 {offsets = [0, 256], sizes = [16, 128], strides = [1, 1]} : vector<16x384xf32> to vector<16x128xf32>
    %21 = arith.truncf %20 : vector<16x128xf32> to vector<16x128xbf16>
    %22 = vector.extract_strided_slice %17 {offsets = [0, 0], sizes = [16, 32], strides = [1, 1]} : vector<16x128xbf16> to vector<16x32xbf16>
    %23 = vector.extract_strided_slice %19 {offsets = [0, 0], sizes = [16, 32], strides = [1, 1]} : vector<16x128xbf16> to vector<16x32xbf16>
    %cst_12 = arith.constant dense<0.000000e+00> : vector<16x16xf32>
    %24 = tpu.matmul %22, %23, %cst_12 {dimension_numbers = #tpu.dot_dimension_numbers<[1], [1], [0], [0], [0, 0, 1, 0], [], []>} : vector<16x32xbf16>, vector<16x32xbf16>, vector<16x16xf32> -> vector<16x16xf32>
    %25 = vector.broadcast %5 : vector<1x16xf32> to vector<16x16xf32>
    %26 = arith.addf %24, %25 : vector<16x16xf32>
    %cst_13 = arith.constant dense<0xFF800000> : vector<16xf32>
    %27 = vector.multi_reduction <maximumf>, %26, %cst_13 [1] : vector<16x16xf32> to vector<16xf32>
    %28 = vector.shape_cast %27 : vector<16xf32> to vector<16x1xf32>
    %29 = vector.broadcast %28 : vector<16x1xf32> to vector<16x16xf32>
    %30 = arith.subf %26, %29 : vector<16x16xf32>
    %31 = math.exp %30 : vector<16x16xf32>
    %cst_14 = arith.constant dense<0.000000e+00> : vector<16xf32>
    %32 = vector.multi_reduction <add>, %31, %cst_14 [1] : vector<16x16xf32> to vector<16xf32>
    %33 = vector.shape_cast %32 : vector<16xf32> to vector<16x1xf32>
    %34 = tpu.reciprocal %33 {approx = true} : vector<16x1xf32> -> vector<16x1xf32>
    %35 = vector.broadcast %34 : vector<16x1xf32> to vector<16x16xf32>
    %36 = arith.mulf %31, %35 : vector<16x16xf32>
    %37 = arith.truncf %36 : vector<16x16xf32> to vector<16x16xbf16>
    %38 = vector.extract_strided_slice %21 {offsets = [0, 0], sizes = [16, 32], strides = [1, 1]} : vector<16x128xbf16> to vector<16x32xbf16>
    %cst_15 = arith.constant dense<0.000000e+00> : vector<16x32xf32>
    %39 = tpu.matmul %37, %38, %cst_15 {dimension_numbers = #tpu.dot_dimension_numbers<[1], [0], [0], [1], [0, 0, 1, 1], [], []>} : vector<16x16xbf16>, vector<16x32xbf16>, vector<16x32xf32> -> vector<16x32xf32>
    %c0_16 = arith.constant 0 : index
    %c0_17 = arith.constant 0 : index
    %40 = vector.load %arg26[%c0_16, %c0_17] : memref<16x128xf32, #tpu.memory_space<vmem>>, vector<16x32xf32>
    tpu.vector_store %arg26[%c0_16, %c0_17], %39 {strides = array<i32>} : memref<16x128xf32, #tpu.memory_space<vmem>>, vector<16x32xf32>,
    %41 = vector.extract_strided_slice %17 {offsets = [0, 32], sizes = [16, 32], strides = [1, 1]} : vector<16x128xbf16> to vector<16x32xbf16>
    %42 = vector.extract_strided_slice %19 {offsets = [0, 32], sizes = [16, 32], strides = [1, 1]} : vector<16x128xbf16> to vector<16x32xbf16>
    %cst_18 = arith.constant dense<0.000000e+00> : vector<16x16xf32>
    %43 = tpu.matmul %41, %42, %cst_18 {dimension_numbers = #tpu.dot_dimension_numbers<[1], [1], [0], [0], [0, 0, 1, 0], [], []>} : vector<16x32xbf16>, vector<16x32xbf16>, vector<16x16xf32> -> vector<16x16xf32>
    %44 = vector.broadcast %5 : vector<1x16xf32> to vector<16x16xf32>
    %45 = arith.addf %43, %44 : vector<16x16xf32>
    %cst_19 = arith.constant dense<0xFF800000> : vector<16xf32>
    %46 = vector.multi_reduction <maximumf>, %45, %cst_19 [1] : vector<16x16xf32> to vector<16xf32>
    %47 = vector.shape_cast %46 : vector<16xf32> to vector<16x1xf32>
    %48 = vector.broadcast %47 : vector<16x1xf32> to vector<16x16xf32>
    %49 = arith.subf %45, %48 : vector<16x16xf32>
    %50 = math.exp %49 : vector<16x16xf32>
    %cst_20 = arith.constant dense<0.000000e+00> : vector<16xf32>
    %51 = vector.multi_reduction <add>, %50, %cst_20 [1] : vector<16x16xf32> to vector<16xf32>
    %52 = vector.shape_cast %51 : vector<16xf32> to vector<16x1xf32>
    %53 = tpu.reciprocal %52 {approx = true} : vector<16x1xf32> -> vector<16x1xf32>
    %54 = vector.broadcast %53 : vector<16x1xf32> to vector<16x16xf32>
    %55 = arith.mulf %50, %54 : vector<16x16xf32>
    %56 = arith.truncf %55 : vector<16x16xf32> to vector<16x16xbf16>
    %57 = vector.extract_strided_slice %21 {offsets = [0, 32], sizes = [16, 32], strides = [1, 1]} : vector<16x128xbf16> to vector<16x32xbf16>
    %cst_21 = arith.constant dense<0.000000e+00> : vector<16x32xf32>
    %58 = tpu.matmul %56, %57, %cst_21 {dimension_numbers = #tpu.dot_dimension_numbers<[1], [0], [0], [1], [0, 0, 1, 1], [], []>} : vector<16x16xbf16>, vector<16x32xbf16>, vector<16x32xf32> -> vector<16x32xf32>
    %c0_22 = arith.constant 0 : index
    %c32 = arith.constant 32 : index
    %59 = vector.load %arg26[%c0_22, %c32] : memref<16x128xf32, #tpu.memory_space<vmem>>, vector<16x32xf32>
    tpu.vector_store %arg26[%c0_22, %c32], %58 {strides = array<i32>} : memref<16x128xf32, #tpu.memory_space<vmem>>, vector<16x32xf32>,
    %60 = vector.extract_strided_slice %17 {offsets = [0, 64], sizes = [16, 32], strides = [1, 1]} : vector<16x128xbf16> to vector<16x32xbf16>
    %61 = vector.extract_strided_slice %19 {offsets = [0, 64], sizes = [16, 32], strides = [1, 1]} : vector<16x128xbf16> to vector<16x32xbf16>
    %cst_23 = arith.constant dense<0.000000e+00> : vector<16x16xf32>
    %62 = tpu.matmul %60, %61, %cst_23 {dimension_numbers = #tpu.dot_dimension_numbers<[1], [1], [0], [0], [0, 0, 1, 0], [], []>} : vector<16x32xbf16>, vector<16x32xbf16>, vector<16x16xf32> -> vector<16x16xf32>
    %63 = vector.broadcast %5 : vector<1x16xf32> to vector<16x16xf32>
    %64 = arith.addf %62, %63 : vector<16x16xf32>
    %cst_24 = arith.constant dense<0xFF800000> : vector<16xf32>
    %65 = vector.multi_reduction <maximumf>, %64, %cst_24 [1] : vector<16x16xf32> to vector<16xf32>
    %66 = vector.shape_cast %65 : vector<16xf32> to vector<16x1xf32>
    %67 = vector.broadcast %66 : vector<16x1xf32> to vector<16x16xf32>
    %68 = arith.subf %64, %67 : vector<16x16xf32>
    %69 = math.exp %68 : vector<16x16xf32>
    %cst_25 = arith.constant dense<0.000000e+00> : vector<16xf32>
    %70 = vector.multi_reduction <add>, %69, %cst_25 [1] : vector<16x16xf32> to vector<16xf32>
    %71 = vector.shape_cast %70 : vector<16xf32> to vector<16x1xf32>
    %72 = tpu.reciprocal %71 {approx = true} : vector<16x1xf32> -> vector<16x1xf32>
    %73 = vector.broadcast %72 : vector<16x1xf32> to vector<16x16xf32>
    %74 = arith.mulf %69, %73 : vector<16x16xf32>
    %75 = arith.truncf %74 : vector<16x16xf32> to vector<16x16xbf16>
    %76 = vector.extract_strided_slice %21 {offsets = [0, 64], sizes = [16, 32], strides = [1, 1]} : vector<16x128xbf16> to vector<16x32xbf16>
    %cst_26 = arith.constant dense<0.000000e+00> : vector<16x32xf32>
    %77 = tpu.matmul %75, %76, %cst_26 {dimension_numbers = #tpu.dot_dimension_numbers<[1], [0], [0], [1], [0, 0, 1, 1], [], []>} : vector<16x16xbf16>, vector<16x32xbf16>, vector<16x32xf32> -> vector<16x32xf32>
    %c0_27 = arith.constant 0 : index
    %c64 = arith.constant 64 : index
    %78 = vector.load %arg26[%c0_27, %c64] : memref<16x128xf32, #tpu.memory_space<vmem>>, vector<16x32xf32>
    tpu.vector_store %arg26[%c0_27, %c64], %77 {strides = array<i32>} : memref<16x128xf32, #tpu.memory_space<vmem>>, vector<16x32xf32>,
    %79 = vector.extract_strided_slice %17 {offsets = [0, 96], sizes = [16, 32], strides = [1, 1]} : vector<16x128xbf16> to vector<16x32xbf16>
    %80 = vector.extract_strided_slice %19 {offsets = [0, 96], sizes = [16, 32], strides = [1, 1]} : vector<16x128xbf16> to vector<16x32xbf16>
    %cst_28 = arith.constant dense<0.000000e+00> : vector<16x16xf32>
    %81 = tpu.matmul %79, %80, %cst_28 {dimension_numbers = #tpu.dot_dimension_numbers<[1], [1], [0], [0], [0, 0, 1, 0], [], []>} : vector<16x32xbf16>, vector<16x32xbf16>, vector<16x16xf32> -> vector<16x16xf32>
    %82 = vector.broadcast %5 : vector<1x16xf32> to vector<16x16xf32>
    %83 = arith.addf %81, %82 : vector<16x16xf32>
    %cst_29 = arith.constant dense<0xFF800000> : vector<16xf32>
    %84 = vector.multi_reduction <maximumf>, %83, %cst_29 [1] : vector<16x16xf32> to vector<16xf32>
    %85 = vector.shape_cast %84 : vector<16xf32> to vector<16x1xf32>
    %86 = vector.broadcast %85 : vector<16x1xf32> to vector<16x16xf32>
    %87 = arith.subf %83, %86 : vector<16x16xf32>
    %88 = math.exp %87 : vector<16x16xf32>
    %cst_30 = arith.constant dense<0.000000e+00> : vector<16xf32>
    %89 = vector.multi_reduction <add>, %88, %cst_30 [1] : vector<16x16xf32> to vector<16xf32>
    %90 = vector.shape_cast %89 : vector<16xf32> to vector<16x1xf32>
    %91 = tpu.reciprocal %90 {approx = true} : vector<16x1xf32> -> vector<16x1xf32>
    %92 = vector.broadcast %91 : vector<16x1xf32> to vector<16x16xf32>
    %93 = arith.mulf %88, %92 : vector<16x16xf32>
    %94 = arith.truncf %93 : vector<16x16xf32> to vector<16x16xbf16>
    %95 = vector.extract_strided_slice %21 {offsets = [0, 96], sizes = [16, 32], strides = [1, 1]} : vector<16x128xbf16> to vector<16x32xbf16>
    %cst_31 = arith.constant dense<0.000000e+00> : vector<16x32xf32>
    %96 = tpu.matmul %94, %95, %cst_31 {dimension_numbers = #tpu.dot_dimension_numbers<[1], [0], [0], [1], [0, 0, 1, 1], [], []>} : vector<16x16xbf16>, vector<16x32xbf16>, vector<16x32xf32> -> vector<16x32xf32>
    %c0_32 = arith.constant 0 : index
    %c96 = arith.constant 96 : index
    %97 = vector.load %arg26[%c0_32, %c96] : memref<16x128xf32, #tpu.memory_space<vmem>>, vector<16x32xf32>
    tpu.vector_store %arg26[%c0_32, %c96], %96 {strides = array<i32>} : memref<16x128xf32, #tpu.memory_space<vmem>>, vector<16x32xf32>,
    %c0_33 = arith.constant 0 : index
    %c0_34 = arith.constant 0 : index
    %98 = vector.load %arg26[%c0_33, %c0_34] : memref<16x128xf32, #tpu.memory_space<vmem>>, vector<16x128xf32>
    %99 = arith.truncf %98 : vector<16x128xf32> to vector<16x128xbf16>
    %c0_35 = arith.constant 0 : index
    %c0_36 = arith.constant 0 : index
    %c0_37 = arith.constant 0 : index
    %100 = vector.load %arg8[%c0_35, %c0_36, %c0_37] : memref<1x128x128xbf16, #tpu.memory_space<vmem>>, vector<1x128x128xbf16>
    %101 = vector.shape_cast %100 : vector<1x128x128xbf16> to vector<128x128xbf16>
    %cst_38 = arith.constant dense<0.000000e+00> : vector<16x128xf32>
    %102 = tpu.matmul %99, %101, %cst_38 {dimension_numbers = #tpu.dot_dimension_numbers<[1], [0], [0], [1], [0, 0, 1, 1], [], []>} : vector<16x128xbf16>, vector<128x128xbf16>, vector<16x128xf32> -> vector<16x128xf32>
    %c0_39 = arith.constant 0 : index
    %c0_40 = arith.constant 0 : index
    %c0_41 = arith.constant 0 : index
    %103 = vector.load %arg9[%c0_39, %c0_40, %c0_41] : memref<1x1x128xf32, #tpu.memory_space<vmem>>, vector<1x1x128xf32>
    %104 = vector.shape_cast %103 : vector<1x1x128xf32> to vector<1x128xf32>
    %105 = vector.broadcast %104 : vector<1x128xf32> to vector<16x128xf32>
    %106 = arith.addf %102, %105 : vector<16x128xf32>
    %107 = arith.addf %3, %106 : vector<16x128xf32>
    %c0_42 = arith.constant 0 : index
    %c0_43 = arith.constant 0 : index
    %c0_44 = arith.constant 0 : index
    %108 = vector.load %arg10[%c0_42, %c0_43, %c0_44] : memref<1x1x128xf32, #tpu.memory_space<vmem>>, vector<1x1x128xf32>
    %109 = vector.shape_cast %108 : vector<1x1x128xf32> to vector<1x128xf32>
    %c0_45 = arith.constant 0 : index
    %c0_46 = arith.constant 0 : index
    %c0_47 = arith.constant 0 : index
    %110 = vector.load %arg11[%c0_45, %c0_46, %c0_47] : memref<1x1x128xf32, #tpu.memory_space<vmem>>, vector<1x1x128xf32>
    %111 = vector.shape_cast %110 : vector<1x1x128xf32> to vector<1x128xf32>
    %cst_48 = arith.constant dense<0.000000e+00> : vector<16xf32>
    %112 = vector.multi_reduction <add>, %107, %cst_48 [1] : vector<16x128xf32> to vector<16xf32>
    %113 = vector.shape_cast %112 : vector<16xf32> to vector<16x1xf32>
    %cst_49 = arith.constant 1.280000e+02 : f32
    %114 = vector.broadcast %cst_49 : f32 to vector<16x1xf32>
    %115 = arith.divf %113, %114 : vector<16x1xf32>
    %116 = vector.broadcast %115 : vector<16x1xf32> to vector<16x128xf32>
    %117 = arith.subf %107, %116 : vector<16x128xf32>
    %118 = arith.mulf %117, %117 : vector<16x128xf32>
    %cst_50 = arith.constant dense<0.000000e+00> : vector<16xf32>
    %119 = vector.multi_reduction <add>, %118, %cst_50 [1] : vector<16x128xf32> to vector<16xf32>
    %120 = vector.shape_cast %119 : vector<16xf32> to vector<16x1xf32>
    %cst_51 = arith.constant 1.280000e+02 : f32
    %121 = vector.broadcast %cst_51 : f32 to vector<16x1xf32>
    %122 = arith.divf %120, %121 : vector<16x1xf32>
    %123 = vector.broadcast %115 : vector<16x1xf32> to vector<16x128xf32>
    %124 = arith.subf %107, %123 : vector<16x128xf32>
    %cst_52 = arith.constant 9.99999996E-13 : f32
    %125 = vector.broadcast %cst_52 : f32 to vector<16x1xf32>
    %126 = arith.addf %122, %125 : vector<16x1xf32>
    %127 = math.rsqrt %126 : vector<16x1xf32>
    %128 = vector.broadcast %127 : vector<16x1xf32> to vector<16x128xf32>
    %129 = arith.mulf %124, %128 : vector<16x128xf32>
    %130 = vector.broadcast %109 : vector<1x128xf32> to vector<16x128xf32>
    %131 = arith.mulf %129, %130 : vector<16x128xf32>
    %132 = vector.broadcast %111 : vector<1x128xf32> to vector<16x128xf32>
    %133 = arith.addf %131, %132 : vector<16x128xf32>
    %134 = arith.truncf %133 : vector<16x128xf32> to vector<16x128xbf16>
    %c0_53 = arith.constant 0 : index
    %c0_54 = arith.constant 0 : index
    %c0_55 = arith.constant 0 : index
    %135 = vector.load %arg12[%c0_53, %c0_54, %c0_55] : memref<1x128x256xbf16, #tpu.memory_space<vmem>>, vector<1x128x256xbf16>
    %136 = vector.shape_cast %135 : vector<1x128x256xbf16> to vector<128x256xbf16>
    %cst_56 = arith.constant dense<0.000000e+00> : vector<16x256xf32>
    %137 = tpu.matmul %134, %136, %cst_56 {dimension_numbers = #tpu.dot_dimension_numbers<[1], [0], [0], [1], [0, 0, 1, 1], [], []>} : vector<16x128xbf16>, vector<128x256xbf16>, vector<16x256xf32> -> vector<16x256xf32>
    %c0_57 = arith.constant 0 : index
    %c0_58 = arith.constant 0 : index
    %c0_59 = arith.constant 0 : index
    %138 = vector.load %arg13[%c0_57, %c0_58, %c0_59] : memref<1x1x256xf32, #tpu.memory_space<vmem>>, vector<1x1x256xf32>
    %139 = vector.shape_cast %138 : vector<1x1x256xf32> to vector<1x256xf32>
    %140 = vector.broadcast %139 : vector<1x256xf32> to vector<16x256xf32>
    %141 = arith.addf %137, %140 : vector<16x256xf32>
    %142 = arith.mulf %141, %141 : vector<16x256xf32>
    %143 = arith.mulf %141, %142 : vector<16x256xf32>
    %cst_60 = arith.constant 4.471500e-02 : f32
    %144 = vector.broadcast %cst_60 : f32 to vector<16x256xf32>
    %145 = arith.mulf %144, %143 : vector<16x256xf32>
    %146 = arith.addf %141, %145 : vector<16x256xf32>
    %cst_61 = arith.constant 0.797884583 : f32
    %147 = vector.broadcast %cst_61 : f32 to vector<16x256xf32>
    %148 = arith.mulf %147, %146 : vector<16x256xf32>
    %149 = math.tanh %148 : vector<16x256xf32>
    %cst_62 = arith.constant 1.000000e+00 : f32
    %150 = vector.broadcast %cst_62 : f32 to vector<16x256xf32>
    %151 = arith.addf %150, %149 : vector<16x256xf32>
    %cst_63 = arith.constant 5.000000e-01 : f32
    %152 = vector.broadcast %cst_63 : f32 to vector<16x256xf32>
    %153 = arith.mulf %152, %151 : vector<16x256xf32>
    %154 = arith.mulf %141, %153 : vector<16x256xf32>
    %155 = arith.truncf %154 : vector<16x256xf32> to vector<16x256xbf16>
    %c0_64 = arith.constant 0 : index
    %c0_65 = arith.constant 0 : index
    %c0_66 = arith.constant 0 : index
    %156 = vector.load %arg14[%c0_64, %c0_65, %c0_66] : memref<1x256x128xbf16, #tpu.memory_space<vmem>>, vector<1x256x128xbf16>
    %157 = vector.shape_cast %156 : vector<1x256x128xbf16> to vector<256x128xbf16>
    %cst_67 = arith.constant dense<0.000000e+00> : vector<16x128xf32>
    %158 = tpu.matmul %155, %157, %cst_67 {dimension_numbers = #tpu.dot_dimension_numbers<[1], [0], [0], [1], [0, 0, 1, 1], [], []>} : vector<16x256xbf16>, vector<256x128xbf16>, vector<16x128xf32> -> vector<16x128xf32>
    %c0_68 = arith.constant 0 : index
    %c0_69 = arith.constant 0 : index
    %c0_70 = arith.constant 0 : index
    %159 = vector.load %arg15[%c0_68, %c0_69, %c0_70] : memref<1x1x128xf32, #tpu.memory_space<vmem>>, vector<1x1x128xf32>
    %160 = vector.shape_cast %159 : vector<1x1x128xf32> to vector<1x128xf32>
    %161 = vector.broadcast %160 : vector<1x128xf32> to vector<16x128xf32>
    %162 = arith.addf %158, %161 : vector<16x128xf32>
    %163 = arith.addf %133, %162 : vector<16x128xf32>
    %c0_71 = arith.constant 0 : index
    %c0_72 = arith.constant 0 : index
    %c0_73 = arith.constant 0 : index
    %164 = vector.load %arg16[%c0_71, %c0_72, %c0_73] : memref<1x1x128xf32, #tpu.memory_space<vmem>>, vector<1x1x128xf32>
    %165 = vector.shape_cast %164 : vector<1x1x128xf32> to vector<1x128xf32>
    %c0_74 = arith.constant 0 : index
    %c0_75 = arith.constant 0 : index
    %c0_76 = arith.constant 0 : index
    %166 = vector.load %arg17[%c0_74, %c0_75, %c0_76] : memref<1x1x128xf32, #tpu.memory_space<vmem>>, vector<1x1x128xf32>
    %167 = vector.shape_cast %166 : vector<1x1x128xf32> to vector<1x128xf32>
    %cst_77 = arith.constant dense<0.000000e+00> : vector<16xf32>
    %168 = vector.multi_reduction <add>, %163, %cst_77 [1] : vector<16x128xf32> to vector<16xf32>
    %169 = vector.shape_cast %168 : vector<16xf32> to vector<16x1xf32>
    %cst_78 = arith.constant 1.280000e+02 : f32
    %170 = vector.broadcast %cst_78 : f32 to vector<16x1xf32>
    %171 = arith.divf %169, %170 : vector<16x1xf32>
    %172 = vector.broadcast %171 : vector<16x1xf32> to vector<16x128xf32>
    %173 = arith.subf %163, %172 : vector<16x128xf32>
    %174 = arith.mulf %173, %173 : vector<16x128xf32>
    %cst_79 = arith.constant dense<0.000000e+00> : vector<16xf32>
    %175 = vector.multi_reduction <add>, %174, %cst_79 [1] : vector<16x128xf32> to vector<16xf32>
    %176 = vector.shape_cast %175 : vector<16xf32> to vector<16x1xf32>
    %cst_80 = arith.constant 1.280000e+02 : f32
    %177 = vector.broadcast %cst_80 : f32 to vector<16x1xf32>
    %178 = arith.divf %176, %177 : vector<16x1xf32>
    %179 = vector.broadcast %171 : vector<16x1xf32> to vector<16x128xf32>
    %180 = arith.subf %163, %179 : vector<16x128xf32>
    %cst_81 = arith.constant 9.99999996E-13 : f32
    %181 = vector.broadcast %cst_81 : f32 to vector<16x1xf32>
    %182 = arith.addf %178, %181 : vector<16x1xf32>
    %183 = math.rsqrt %182 : vector<16x1xf32>
    %184 = vector.broadcast %183 : vector<16x1xf32> to vector<16x128xf32>
    %185 = arith.mulf %180, %184 : vector<16x128xf32>
    %186 = vector.broadcast %165 : vector<1x128xf32> to vector<16x128xf32>
    %187 = arith.mulf %185, %186 : vector<16x128xf32>
    %188 = vector.broadcast %167 : vector<1x128xf32> to vector<16x128xf32>
    %189 = arith.addf %187, %188 : vector<16x128xf32>
    %c0_82 = arith.constant 0 : index
    %c0_83 = arith.constant 0 : index
    %190 = vector.load %arg25[%c0_82, %c0_83] : memref<16x128xf32, #tpu.memory_space<vmem>>, vector<16x128xf32>
    tpu.vector_store %arg25[%c0_82, %c0_83], %189 {strides = array<i32>} : memref<16x128xf32, #tpu.memory_space<vmem>>, vector<16x128xf32>,
    %c1_i32 = arith.constant 1 : i32
    %191 = arith.cmpi eq, %arg1, %c1_i32 : i32
    %192 = arith.extui %191 : i1 to i32
    %c0_i32_84 = arith.constant 0 : i32
    %193 = arith.cmpi ne, %192, %c0_i32_84 : i32
    scf.if %193 {
      %194 = vector.extract_strided_slice %189 {offsets = [0, 0], sizes = [1, 128], strides = [1, 1]} : vector<16x128xf32> to vector<1x128xf32>
      %195 = arith.truncf %194 : vector<1x128xf32> to vector<1x128xbf16>
      %c0_85 = arith.constant 0 : index
      %c0_86 = arith.constant 0 : index
      %196 = vector.load %arg18[%c0_85, %c0_86] : memref<128x128xbf16, #tpu.memory_space<vmem>>, vector<128x128xbf16>
      %cst_87 = arith.constant dense<0.000000e+00> : vector<1x128xf32>
      %197 = tpu.matmul %195, %196, %cst_87 {dimension_numbers = #tpu.dot_dimension_numbers<[1], [0], [0], [1], [0, 0, 1, 1], [], []>} : vector<1x128xbf16>, vector<128x128xbf16>, vector<1x128xf32> -> vector<1x128xf32>
      %c0_88 = arith.constant 0 : index
      %c0_89 = arith.constant 0 : index
      %198 = vector.load %arg19[%c0_88, %c0_89] : memref<1x128xf32, #tpu.memory_space<vmem>>, vector<1x128xf32>
      %199 = arith.addf %197, %198 : vector<1x128xf32>
      %cst_90 = arith.constant 0.000000e+00 : f32
      %200 = vector.broadcast %cst_90 : f32 to vector<1x128xf32>
      %201 = arith.maximumf %199, %200 : vector<1x128xf32>
      %202 = arith.truncf %201 : vector<1x128xf32> to vector<1x128xbf16>
      %c0_91 = arith.constant 0 : index
      %c0_92 = arith.constant 0 : index
      %203 = vector.load %arg20[%c0_91, %c0_92] : memref<128x4xbf16, #tpu.memory_space<vmem>>, vector<128x4xbf16>
      %cst_93 = arith.constant dense<0.000000e+00> : vector<1x4xf32>
      %204 = tpu.matmul %202, %203, %cst_93 {dimension_numbers = #tpu.dot_dimension_numbers<[1], [0], [0], [1], [0, 0, 1, 1], [], []>} : vector<1x128xbf16>, vector<128x4xbf16>, vector<1x4xf32> -> vector<1x4xf32>
      %c0_94 = arith.constant 0 : index
      %c0_95 = arith.constant 0 : index
      %205 = vector.load %arg21[%c0_94, %c0_95] : memref<1x4xf32, #tpu.memory_space<vmem>>, vector<1x4xf32>
      %206 = arith.addf %204, %205 : vector<1x4xf32>
      %c0_96 = arith.constant 0 : index
      %c0_97 = arith.constant 0 : index
      %c0_98 = arith.constant 0 : index
      %207 = vector.load %arg23[%c0_96, %c0_97, %c0_98] : memref<1x1x4xf32, #tpu.memory_space<vmem>>, vector<1x1x4xf32>
      %208 = vector.shape_cast %207 : vector<1x1x4xf32> to vector<1x4xf32>
      %209 = vector.shape_cast %206 : vector<1x4xf32> to vector<1x1x4xf32>
      tpu.vector_store %arg23[%c0_96, %c0_97, %c0_98], %209 {strides = array<i32>} : memref<1x1x4xf32, #tpu.memory_space<vmem>>, vector<1x1x4xf32>,
      %c0_99 = arith.constant 0 : index
      %c0_100 = arith.constant 0 : index
      %c0_101 = arith.constant 0 : index
      %210 = vector.load %arg22[%c0_99, %c0_100, %c0_101] : memref<1x1x4xf32, #tpu.memory_space<vmem>>, vector<1x1x4xf32>
      %211 = vector.shape_cast %210 : vector<1x1x4xf32> to vector<1x4xf32>
      %cst_102 = arith.constant 0.000000e+00 : f32
      %212 = vector.broadcast %cst_102 : f32 to vector<1x4xf32>
      %213 = arith.maximumf %206, %212 : vector<1x4xf32>
      %214 = arith.mulf %206, %211 : vector<1x4xf32>
      %215 = arith.subf %213, %214 : vector<1x4xf32>
      %216 = math.absf %206 : vector<1x4xf32>
      %cst_103 = arith.constant 0.000000e+00 : f32
      %217 = vector.broadcast %cst_103 : f32 to vector<1x4xf32>
      %218 = arith.subf %217, %216 : vector<1x4xf32>
      %219 = math.exp %218 : vector<1x4xf32>
      %220 = math.log1p %219 : vector<1x4xf32>
      %221 = arith.addf %215, %220 : vector<1x4xf32>
      %222 = vector.shape_cast %221 : vector<1x4xf32> to vector<1x1x4xf32>
      %cst_104 = arith.constant dense<0.000000e+00> : vector<1xf32>
      %223 = vector.multi_reduction <add>, %222, %cst_104 [1, 2] : vector<1x1x4xf32> to vector<1xf32>
      %224 = vector.shape_cast %223 : vector<1xf32> to vector<1x1x1xf32>
      %225 = vector.extract %224[0, 0, 0] : f32 from vector<1x1x1xf32>
      %226 = vector.broadcast %225 : f32 to vector<1x1xf32>
      %c0_105 = arith.constant 0 : index
      %c0_106 = arith.constant 0 : index
      %c0_107 = arith.constant 0 : index
      %227 = vector.load %arg24[%c0_105, %c0_106, %c0_107] : memref<1x1x1xf32, #tpu.memory_space<vmem>>, vector<1x1x1xf32>
      %228 = vector.shape_cast %227 : vector<1x1x1xf32> to vector<1x1xf32>
      %229 = vector.shape_cast %226 : vector<1x1xf32> to vector<1x1x1xf32>
      tpu.vector_store %arg24[%c0_105, %c0_106, %c0_107], %229 {strides = array<i32>} : memref<1x1x1xf32, #tpu.memory_space<vmem>>, vector<1x1x1xf32>,
    } else {
    }
    return
  }
  func.func @transform_0(%arg0: i32, %arg1: i32) -> (i32, i32, i32) {
    %c0_i32 = arith.constant 0 : i32
    %c0_i32_0 = arith.constant 0 : i32
    %c0_i32_1 = arith.constant 0 : i32
    return %arg0, %c0_i32, %c0_i32_0 : i32, i32, i32
  }
  func.func @transform_1(%arg0: i32, %arg1: i32) -> (i32, i32, i32) {
    %c0_i32 = arith.constant 0 : i32
    %c0_i32_0 = arith.constant 0 : i32
    %c0_i32_1 = arith.constant 0 : i32
    return %arg0, %c0_i32, %c0_i32_0 : i32, i32, i32
  }
  func.func @transform_2(%arg0: i32, %arg1: i32) -> (i32, i32) {
    %c0_i32 = arith.constant 0 : i32
    %c0_i32_0 = arith.constant 0 : i32
    %c0_i32_1 = arith.constant 0 : i32
    return %c0_i32, %c0_i32_0 : i32, i32
  }
  func.func @transform_3(%arg0: i32, %arg1: i32) -> (i32, i32) {
    %c0_i32 = arith.constant 0 : i32
    %c0_i32_0 = arith.constant 0 : i32
    %c0_i32_1 = arith.constant 0 : i32
    return %c0_i32, %c0_i32_0 : i32, i32
  }
  func.func @transform_4(%arg0: i32, %arg1: i32) -> (i32, i32, i32) {
    %c0_i32 = arith.constant 0 : i32
    %c0_i32_0 = arith.constant 0 : i32
    %c0_i32_1 = arith.constant 0 : i32
    return %arg1, %c0_i32, %c0_i32_0 : i32, i32, i32
  }
  func.func @transform_5(%arg0: i32, %arg1: i32) -> (i32, i32, i32) {
    %c0_i32 = arith.constant 0 : i32
    %c0_i32_0 = arith.constant 0 : i32
    %c0_i32_1 = arith.constant 0 : i32
    return %arg1, %c0_i32, %c0_i32_0 : i32, i32, i32
  }
  func.func @transform_6(%arg0: i32, %arg1: i32) -> (i32, i32, i32) {
    %c0_i32 = arith.constant 0 : i32
    %c0_i32_0 = arith.constant 0 : i32
    %c0_i32_1 = arith.constant 0 : i32
    return %arg1, %c0_i32, %c0_i32_0 : i32, i32, i32
  }
  func.func @transform_7(%arg0: i32, %arg1: i32) -> (i32, i32, i32) {
    %c0_i32 = arith.constant 0 : i32
    %c0_i32_0 = arith.constant 0 : i32
    %c0_i32_1 = arith.constant 0 : i32
    return %arg1, %c0_i32, %c0_i32_0 : i32, i32, i32
  }
  func.func @transform_8(%arg0: i32, %arg1: i32) -> (i32, i32, i32) {
    %c0_i32 = arith.constant 0 : i32
    %c0_i32_0 = arith.constant 0 : i32
    %c0_i32_1 = arith.constant 0 : i32
    return %arg1, %c0_i32, %c0_i32_0 : i32, i32, i32
  }
  func.func @transform_9(%arg0: i32, %arg1: i32) -> (i32, i32, i32) {
    %c0_i32 = arith.constant 0 : i32
    %c0_i32_0 = arith.constant 0 : i32
    %c0_i32_1 = arith.constant 0 : i32
    return %arg1, %c0_i32, %c0_i32_0 : i32, i32, i32
  }
  func.func @transform_10(%arg0: i32, %arg1: i32) -> (i32, i32, i32) {
    %c0_i32 = arith.constant 0 : i32
    %c0_i32_0 = arith.constant 0 : i32
    %c0_i32_1 = arith.constant 0 : i32
    return %arg1, %c0_i32, %c0_i32_0 : i32, i32, i32
  }
  func.func @transform_11(%arg0: i32, %arg1: i32) -> (i32, i32, i32) {
    %c0_i32 = arith.constant 0 : i32
    %c0_i32_0 = arith.constant 0 : i32
    %c0_i32_1 = arith.constant 0 : i32
    return %arg1, %c0_i32, %c0_i32_0 : i32, i32, i32
  }
  func.func @transform_12(%arg0: i32, %arg1: i32) -> (i32, i32, i32) {
    %c0_i32 = arith.constant 0 : i32
    %c0_i32_0 = arith.constant 0 : i32
    %c0_i32_1 = arith.constant 0 : i32
    return %arg1, %c0_i32, %c0_i32_0 : i32, i32, i32
  }
  func.func @transform_13(%arg0: i32, %arg1: i32) -> (i32, i32, i32) {
    %c0_i32 = arith.constant 0 : i32
    %c0_i32_0 = arith.constant 0 : i32
    %c0_i32_1 = arith.constant 0 : i32
    return %arg1, %c0_i32, %c0_i32_0 : i32, i32, i32
  }
  func.func @transform_14(%arg0: i32, %arg1: i32) -> (i32, i32, i32) {
    %c0_i32 = arith.constant 0 : i32
    %c0_i32_0 = arith.constant 0 : i32
    %c0_i32_1 = arith.constant 0 : i32
    return %arg1, %c0_i32, %c0_i32_0 : i32, i32, i32
  }
  func.func @transform_15(%arg0: i32, %arg1: i32) -> (i32, i32, i32) {
    %c0_i32 = arith.constant 0 : i32
    %c0_i32_0 = arith.constant 0 : i32
    %c0_i32_1 = arith.constant 0 : i32
    return %arg1, %c0_i32, %c0_i32_0 : i32, i32, i32
  }
  func.func @transform_16(%arg0: i32, %arg1: i32) -> (i32, i32) {
    %c0_i32 = arith.constant 0 : i32
    %c0_i32_0 = arith.constant 0 : i32
    %c0_i32_1 = arith.constant 0 : i32
    return %c0_i32, %c0_i32_0 : i32, i32
  }
  func.func @transform_17(%arg0: i32, %arg1: i32) -> (i32, i32) {
    %c0_i32 = arith.constant 0 : i32
    %c0_i32_0 = arith.constant 0 : i32
    %c0_i32_1 = arith.constant 0 : i32
    return %c0_i32, %c0_i32_0 : i32, i32
  }
  func.func @transform_18(%arg0: i32, %arg1: i32) -> (i32, i32) {
    %c0_i32 = arith.constant 0 : i32
    %c0_i32_0 = arith.constant 0 : i32
    %c0_i32_1 = arith.constant 0 : i32
    return %c0_i32, %c0_i32_0 : i32, i32
  }
  func.func @transform_19(%arg0: i32, %arg1: i32) -> (i32, i32) {
    %c0_i32 = arith.constant 0 : i32
    %c0_i32_0 = arith.constant 0 : i32
    %c0_i32_1 = arith.constant 0 : i32
    return %c0_i32, %c0_i32_0 : i32, i32
  }
  func.func @transform_20(%arg0: i32, %arg1: i32) -> (i32, i32, i32) {
    %c0_i32 = arith.constant 0 : i32
    %c0_i32_0 = arith.constant 0 : i32
    %c0_i32_1 = arith.constant 0 : i32
    return %arg0, %c0_i32, %c0_i32_0 : i32, i32, i32
  }
  func.func @transform_21(%arg0: i32, %arg1: i32) -> (i32, i32, i32) {
    %c0_i32 = arith.constant 0 : i32
    %c0_i32_0 = arith.constant 0 : i32
    %c0_i32_1 = arith.constant 0 : i32
    return %arg0, %c0_i32, %c0_i32_0 : i32, i32, i32
  }
  func.func @transform_22(%arg0: i32, %arg1: i32) -> (i32, i32, i32) {
    %c0_i32 = arith.constant 0 : i32
    %c0_i32_0 = arith.constant 0 : i32
    %c0_i32_1 = arith.constant 0 : i32
    return %arg0, %c0_i32, %c0_i32_0 : i32, i32, i32
  }
}

</mosaic_0001>

<llo_original>
// kernel: text_model_forward.1
$region0: #{text_model_forward.1}
  #allocation0 [shape = 'u32[]', space=smem, size = 0x4, offset = 0x4, fixed_abs, tag = 'smem constant byte address 0x4 - core index']
  #allocation1 [shape = 'u32[72,128]{1,0:T(1,128)}', space=vmem, size = 0x9000, scoped, tag = 'internal scratch']
  #allocation2 [shape = 'f32[16,128]{1,0:T(8,128)}', space=vmem, size = 0x2000, scoped, tag = 'scratch operand']
  #allocation3 [shape = 'f32[16,128]{1,0:T(8,128)}', space=vmem, size = 0x2000, scoped, tag = 'scratch operand']
  %s0 = inlined_call_operand.vmem [shape: f32[2,16,128], index: 0, kind: input, shape index: {}]
  %s1 = inlined_call_operand.vmem [shape: f32[2,1,16], index: 1, kind: input, shape index: {}]
  %s2 = inlined_call_operand.vmem [shape: f32[1,128], index: 2, kind: input, shape index: {}]
  %s3 = inlined_call_operand.vmem [shape: f32[1,128], index: 3, kind: input, shape index: {}]
  %s4 = inlined_call_operand.vmem [shape: bf16[2,128,384], index: 4, kind: input, shape index: {}]
  %s5 = inlined_call_operand.vmem [shape: f32[2,1,384], index: 5, kind: input, shape index: {}]
  %s6 = inlined_call_operand.vmem [shape: bf16[2,128,128], index: 6, kind: input, shape index: {}]
  %s7 = inlined_call_operand.vmem [shape: f32[2,1,128], index: 7, kind: input, shape index: {}]
  %s8 = inlined_call_operand.vmem [shape: f32[2,1,128], index: 8, kind: input, shape index: {}]
  %s9 = inlined_call_operand.vmem [shape: f32[2,1,128], index: 9, kind: input, shape index: {}]
  %s10 = inlined_call_operand.hbm [shape: bf16[2,128,256], index: 10, kind: input, shape index: {}]
  %s11 = inlined_call_operand.vmem [shape: f32[2,1,256], index: 11, kind: input, shape index: {}]
  %s12 = inlined_call_operand.hbm [shape: bf16[2,256,128], index: 12, kind: input, shape index: {}]
  %s13 = inlined_call_operand.vmem [shape: f32[2,1,128], index: 13, kind: input, shape index: {}]
  %s14 = inlined_call_operand.vmem [shape: f32[2,1,128], index: 14, kind: input, shape index: {}]
  %s15 = inlined_call_operand.vmem [shape: f32[2,1,128], index: 15, kind: input, shape index: {}]
  %s16 = inlined_call_operand.vmem [shape: bf16[128,128], index: 16, kind: input, shape index: {}]
  %s17 = inlined_call_operand.vmem [shape: f32[1,128], index: 17, kind: input, shape index: {}]
  %s18 = inlined_call_operand.vmem [shape: bf16[128,4], index: 18, kind: input, shape index: {}]
  %s19 = inlined_call_operand.vmem [shape: f32[1,4], index: 19, kind: input, shape index: {}]
  %s20 = inlined_call_operand.vmem [shape: f32[2,1,4], index: 20, kind: input, shape index: {}]
  %s21 = inlined_call_operand.hbm [shape: f32[2,1,4], index: 21, kind: output, shape index: {0}]
  %s22 = inlined_call_operand.vmem [shape: f32[2,1,1], index: 22, kind: output, shape index: {1}]
  %23 = xla_tuple %s21, %s22
  %s24 = sld [smem:[#allocation0]]
  $region141: #{text_model_forward.1} parent=0
    _
  %s26 = ssub.s32 1, %s24
  %s27 = scalar_select 0, %s26, %s24
  $region1: #{text_model_forward.1} parent=0
    #allocation4 [shape = 'u8[131072]{0}', space=vmem, size = 0x20000, scoped, tag = 'input window, operand 10']
    #allocation5 [shape = 's32[2]{0}', space=sflag, size = 0x8, scoped, tag = 'scoped memory for text_model_forward.1']
    #allocation6 [shape = 's32[2]{0}', space=sflag, size = 0x8, scoped, tag = 'scoped memory for text_model_forward.1']
    #allocation7 [shape = 'u8[131072]{0}', space=vmem, size = 0x20000, scoped, tag = 'input window, operand 12']
    #allocation8 [shape = 's32[2]{0}', space=sflag, size = 0x8, scoped, tag = 'scoped memory for text_model_forward.1']
    #allocation9 [shape = 'u8[1024]{0}', space=vmem, size = 0x400, scoped, tag = 'output window, operand 0']
    %28 = vsyncpa [#allocation5], 0
    %s29 = scalar_lea.sflag [#allocation5], 1
    %30 = vsyncpa %s29, 0
    %31 = vsyncpa [#allocation8], 0
    %s32 = scalar_lea.sflag [#allocation8], 1
    %33 = vsyncpa %s32, 0
    %34 = vsyncpa [#allocation6], 0
    %s35 = scalar_lea.sflag [#allocation6], 1
    %36 = vsyncpa %s35, 0
    loop: start=0, step=1, limit=6
    $region2: #{text_model_forward.1} parent=1 // loop_pre_header
      _
    $region3: #{text_model_forward.1} parent=1 // loop_header
      %s38 = sphi 0, %s42
      %p39 = scmp.ge.s32.totalorder %s38, 6
      %s45 = sphi 0, %s57
      %s46 = sphi 0, %s53
      %s47 = sphi 0, %s45
      %s48 = sphi 0, %s46
      %s49 = sphi 0, %s47
      %s50 = sphi 0, %s48
      %s60 = sphi 0, %s62
      %s63 = sphi 0, %s60
      %s64 = sphi 0, %s63
      %s80 = sphi 0, %s64
      %s86 = sphi 0, %s88
      %s89 = sphi 0, %s86
      %s90 = sphi 0, %s89
      %s106 = sphi 0, %s90
      %s110 = sphi 0, %s110
      %s112 = sphi 0, %s110
      %s113 = sphi 0, %s112
      %s127 = sphi 0, %s113
      %s131 = sphi 0, %s131
      %s133 = sphi 0, %s131
      %s134 = sphi 0, %s133
      %s148 = sphi 0, %s134
      %s154 = sphi 0, %s156
      %s157 = sphi 0, %s154
      %s158 = sphi 0, %s157
      %s174 = sphi 0, %s158
      %s180 = sphi 0, %s182
      %s183 = sphi 0, %s180
      %s184 = sphi 0, %s183
      %s200 = sphi 0, %s184
      %s206 = sphi 0, %s208
      %s209 = sphi 0, %s206
      %s210 = sphi 0, %s209
      %s226 = sphi 0, %s210
      %s232 = sphi 0, %s234
      %s235 = sphi 0, %s232
      %s236 = sphi 0, %s235
      %s252 = sphi 0, %s236
      %s258 = sphi 0, %s260
      %s261 = sphi 0, %s258
      %s262 = sphi 0, %s261
      %s278 = sphi 0, %s262
      %s284 = sphi 0, %s286
      %s287 = sphi 0, %s284
      %s288 = sphi 0, %s287
      %s304 = sphi 0, %s288
      %s310 = sphi 0, %s312
      %s313 = sphi 0, %s310
      %s314 = sphi 0, %s313
      %s330 = sphi 0, %s314
      %s336 = sphi 0, %s338
      %s339 = sphi 0, %s336
      %s340 = sphi 0, %s339
      %s356 = sphi 0, %s340
      %s362 = sphi 0, %s364
      %s365 = sphi 0, %s362
      %s366 = sphi 0, %s365
      %s382 = sphi 0, %s366
      %s388 = sphi 0, %s390
      %s391 = sphi 0, %s388
      %s392 = sphi 0, %s391
      %s408 = sphi 0, %s392
      %s414 = sphi 0, %s416
      %s417 = sphi 0, %s414
      %s418 = sphi 0, %s417
      %s434 = sphi 0, %s418
      %s440 = sphi 0, %s442
      %s443 = sphi 0, %s440
      %s444 = sphi 0, %s443
      %s460 = sphi 0, %s444
      %s464 = sphi 0, %s464
      %s466 = sphi 0, %s464
      %s467 = sphi 0, %s466
      %s481 = sphi 0, %s467
      %s485 = sphi 0, %s485
      %s487 = sphi 0, %s485
      %s488 = sphi 0, %s487
      %s502 = sphi 0, %s488
      %s506 = sphi 0, %s506
      %s508 = sphi 0, %s506
      %s509 = sphi 0, %s508
      %s523 = sphi 0, %s509
      %s527 = sphi 0, %s527
      %s529 = sphi 0, %s527
      %s530 = sphi 0, %s529
      %s544 = sphi 0, %s530
      %s550 = sphi 0, %s552
      %s553 = sphi 0, %s550
      %s554 = sphi 0, %s553
      %s570 = sphi 0, %s554
      %s576 = sphi 0, %s578
      %s579 = sphi 0, %s576
      %s580 = sphi 0, %s579
      %s596 = sphi 0, %s580
      %s602 = sphi 0, %s604
      %s605 = sphi 0, %s602
      %s606 = sphi 0, %s605
      %s622 = sphi 0, %s606
    $region4: #{text_model_forward.1} parent=1 // loop_header_branch
      %41 = sbr.rel (%p39) target = $region8
    $region5: #{text_model_forward.1} parent=1 // loop_body
      %s43 = ssub.s32 %s38, 1
      %s44 = ssub.s32 %s38, 2
      %s51 = sadd.s32 1, %s46
      %p52 = scmp.ge.s32.totalorder %s51, 2
      %s53 = scalar_select %p52, 0, %s51
      %s54 = sadd.s32 1, %s45
      %s55 = scalar_select %p52, %s54, %s45
      %p56 = scmp.ge.s32.totalorder %s55, 2
      %s57 = scalar_select %p56, 0, %s55
      %s58 = ssub.s32 %s45, %s57
      %p59 = scmp.eq.s32.totalorder %s58, 0
      %s61 = sadd.s32 %s60, 1
      %s62 = scalar_select %p59, %s60, %s61
      %p65 = pneg %p59
      %p66 = scmp.eq.s32.totalorder %s38, 3
      %p67 = por %p65, %p66
      %p68 = scmp.ne.s32.totalorder %s60, %s63
      %p69 = scmp.eq.s32.totalorder %s38, 0
      %p70 = por %p68, %p69
      %p71 = scmp.ne.s32.totalorder %s60, %s63
      %p72 = scmp.eq.s32.totalorder %s43, 3
      %p73 = por %p71, %p72
      %p74 = scmp.ne.s32.totalorder %s63, %s64
      %p75 = scmp.eq.s32.totalorder %s43, 0
      %p76 = por %p74, %p75
      %p77 = scmp.ne.s32.totalorder %s63, %s64
      %p78 = scmp.eq.s32.totalorder %s44, 3
      %p79 = por %p77, %p78
      %p81 = scmp.ne.s32.totalorder %s64, %s80
      %p82 = scmp.eq.s32.totalorder %s44, 0
      %p83 = por %p81, %p82
      %s84 = ssub.s32 %s45, %s57
      %p85 = scmp.eq.s32.totalorder %s84, 0
      %s87 = sadd.s32 %s86, 1
      %s88 = scalar_select %p85, %s86, %s87
      %p91 = pneg %p85
      %p92 = scmp.eq.s32.totalorder %s38, 3
      %p93 = por %p91, %p92
      %p94 = scmp.ne.s32.totalorder %s86, %s89
      %p95 = scmp.eq.s32.totalorder %s38, 0
      %p96 = por %p94, %p95
      %p97 = scmp.ne.s32.totalorder %s86, %s89
      %p98 = scmp.eq.s32.totalorder %s43, 3
      %p99 = por %p97, %p98
      %p100 = scmp.ne.s32.totalorder %s89, %s90
      %p101 = scmp.eq.s32.totalorder %s43, 0
      %p102 = por %p100, %p101
      %p103 = scmp.ne.s32.totalorder %s89, %s90
      %p104 = scmp.eq.s32.totalorder %s44, 3
      %p105 = por %p103, %p104
      %p107 = scmp.ne.s32.totalorder %s90, %s106
      %p108 = scmp.eq.s32.totalorder %s44, 0
      %p109 = por %p107, %p108
      %s111 = sadd.s32 %s110, 1
      %p114 = scmp.eq.s32.totalorder %s38, 3
      %p115 = scmp.ne.s32.totalorder %s110, %s112
      %p116 = scmp.eq.s32.totalorder %s38, 0
      %p117 = por %p115, %p116
      %p118 = scmp.ne.s32.totalorder %s110, %s112
      %p119 = scmp.eq.s32.totalorder %s43, 3
      %p120 = por %p118, %p119
      %p121 = scmp.ne.s32.totalorder %s112, %s113
      %p122 = scmp.eq.s32.totalorder %s43, 0
      %p123 = por %p121, %p122
      %p124 = scmp.ne.s32.totalorder %s112, %s113
      %p125 = scmp.eq.s32.totalorder %s44, 3
      %p126 = por %p124, %p125
      %p128 = scmp.ne.s32.totalorder %s113, %s127
      %p129 = scmp.eq.s32.totalorder %s44, 0
      %p130 = por %p128, %p129
      %s132 = sadd.s32 %s131, 1
      %p135 = scmp.eq.s32.totalorder %s38, 3
      %p136 = scmp.ne.s32.totalorder %s131, %s133
      %p137 = scmp.eq.s32.totalorder %s38, 0
      %p138 = por %p136, %p137
      %p139 = scmp.ne.s32.totalorder %s131, %s133
      %p140 = scmp.eq.s32.totalorder %s43, 3
      %p141 = por %p139, %p140
      %p142 = scmp.ne.s32.totalorder %s133, %s134
      %p143 = scmp.eq.s32.totalorder %s43, 0
      %p144 = por %p142, %p143
      %p145 = scmp.ne.s32.totalorder %s133, %s134
      %p146 = scmp.eq.s32.totalorder %s44, 3
      %p147 = por %p145, %p146
      %p149 = scmp.ne.s32.totalorder %s134, %s148
      %p150 = scmp.eq.s32.totalorder %s44, 0
      %p151 = por %p149, %p150
      %s152 = ssub.s32 %s46, %s53
      %p153 = scmp.eq.s32.totalorder %s152, 0
      %s155 = sadd.s32 %s154, 1
      %s156 = scalar_select %p153, %s154, %s155
      %p159 = pneg %p153
      %p160 = scmp.eq.s32.totalorder %s38, 3
      %p161 = por %p159, %p160
      %p162 = scmp.ne.s32.totalorder %s154, %s157
      %p163 = scmp.eq.s32.totalorder %s38, 0
      %p164 = por %p162, %p163
      %p165 = scmp.ne.s32.totalorder %s154, %s157
      %p166 = scmp.eq.s32.totalorder %s43, 3
      %p167 = por %p165, %p166
      %p168 = scmp.ne.s32.totalorder %s157, %s158
      %p169 = scmp.eq.s32.totalorder %s43, 0
      %p170 = por %p168, %p169
      %p171 = scmp.ne.s32.totalorder %s157, %s158
      %p172 = scmp.eq.s32.totalorder %s44, 3
      %p173 = por %p171, %p172
      %p175 = scmp.ne.s32.totalorder %s158, %s174
      %p176 = scmp.eq.s32.totalorder %s44, 0
      %p177 = por %p175, %p176
      %s178 = ssub.s32 %s46, %s53
      %p179 = scmp.eq.s32.totalorder %s178, 0
      %s181 = sadd.s32 %s180, 1
      %s182 = scalar_select %p179, %s180, %s181
      %p185 = pneg %p179
      %p186 = scmp.eq.s32.totalorder %s38, 3
      %p187 = por %p185, %p186
      %p188 = scmp.ne.s32.totalorder %s180, %s183
      %p189 = scmp.eq.s32.totalorder %s38, 0
      %p190 = por %p188, %p189
      %p191 = scmp.ne.s32.totalorder %s180, %s183
      %p192 = scmp.eq.s32.totalorder %s43, 3
      %p193 = por %p191, %p192
      %p194 = scmp.ne.s32.totalorder %s183, %s184
      %p195 = scmp.eq.s32.totalorder %s43, 0
      %p196 = por %p194, %p195
      %p197 = scmp.ne.s32.totalorder %s183, %s184
      %p198 = scmp.eq.s32.totalorder %s44, 3
      %p199 = por %p197, %p198
      %p201 = scmp.ne.s32.totalorder %s184, %s200
      %p202 = scmp.eq.s32.totalorder %s44, 0
      %p203 = por %p201, %p202
      %s204 = ssub.s32 %s46, %s53
      %p205 = scmp.eq.s32.totalorder %s204, 0
      %s207 = sadd.s32 %s206, 1
      %s208 = scalar_select %p205, %s206, %s207
      %p211 = pneg %p205
      %p212 = scmp.eq.s32.totalorder %s38, 3
      %p213 = por %p211, %p212
      %p214 = scmp.ne.s32.totalorder %s206, %s209
      %p215 = scmp.eq.s32.totalorder %s38, 0
      %p216 = por %p214, %p215
      %p217 = scmp.ne.s32.totalorder %s206, %s209
      %p218 = scmp.eq.s32.totalorder %s43, 3
      %p219 = por %p217, %p218
      %p220 = scmp.ne.s32.totalorder %s209, %s210
      %p221 = scmp.eq.s32.totalorder %s43, 0
      %p222 = por %p220, %p221
      %p223 = scmp.ne.s32.totalorder %s209, %s210
      %p224 = scmp.eq.s32.totalorder %s44, 3
      %p225 = por %p223, %p224
      %p227 = scmp.ne.s32.totalorder %s210, %s226
      %p228 = scmp.eq.s32.totalorder %s44, 0
      %p229 = por %p227, %p228
      %s230 = ssub.s32 %s46, %s53
      %p231 = scmp.eq.s32.totalorder %s230, 0
      %s233 = sadd.s32 %s232, 1
      %s234 = scalar_select %p231, %s232, %s233
      %p237 = pneg %p231
      %p238 = scmp.eq.s32.totalorder %s38, 3
      %p239 = por %p237, %p238
      %p240 = scmp.ne.s32.totalorder %s232, %s235
      %p241 = scmp.eq.s32.totalorder %s38, 0
      %p242 = por %p240, %p241
      %p243 = scmp.ne.s32.totalorder %s232, %s235
      %p244 = scmp.eq.s32.totalorder %s43, 3
      %p245 = por %p243, %p244
      %p246 = scmp.ne.s32.totalorder %s235, %s236
      %p247 = scmp.eq.s32.totalorder %s43, 0
      %p248 = por %p246, %p247
      %p249 = scmp.ne.s32.totalorder %s235, %s236
      %p250 = scmp.eq.s32.totalorder %s44, 3
      %p251 = por %p249, %p250
      %p253 = scmp.ne.s32.totalorder %s236, %s252
      %p254 = scmp.eq.s32.totalorder %s44, 0
      %p255 = por %p253, %p254
      %s256 = ssub.s32 %s46, %s53
      %p257 = scmp.eq.s32.totalorder %s256, 0
      %s259 = sadd.s32 %s258, 1
      %s260 = scalar_select %p257, %s258, %s259
      %p263 = pneg %p257
      %p264 = scmp.eq.s32.totalorder %s38, 3
      %p265 = por %p263, %p264
      %p266 = scmp.ne.s32.totalorder %s258, %s261
      %p267 = scmp.eq.s32.totalorder %s38, 0
      %p268 = por %p266, %p267
      %p269 = scmp.ne.s32.totalorder %s258, %s261
      %p270 = scmp.eq.s32.totalorder %s43, 3
      %p271 = por %p269, %p270
      %p272 = scmp.ne.s32.totalorder %s261, %s262
      %p273 = scmp.eq.s32.totalorder %s43, 0
      %p274 = por %p272, %p273
      %p275 = scmp.ne.s32.totalorder %s261, %s262
      %p276 = scmp.eq.s32.totalorder %s44, 3
      %p277 = por %p275, %p276
      %p279 = scmp.ne.s32.totalorder %s262, %s278
      %p280 = scmp.eq.s32.totalorder %s44, 0
      %p281 = por %p279, %p280
      %s282 = ssub.s32 %s46, %s53
      %p283 = scmp.eq.s32.totalorder %s282, 0
      %s285 = sadd.s32 %s284, 1
      %s286 = scalar_select %p283, %s284, %s285
      %p289 = pneg %p283
      %p290 = scmp.eq.s32.totalorder %s38, 3
      %p291 = por %p289, %p290
      %p292 = scmp.ne.s32.totalorder %s284, %s287
      %p293 = scmp.eq.s32.totalorder %s38, 0
      %p294 = por %p292, %p293
      %p295 = scmp.ne.s32.totalorder %s284, %s287
      %p296 = scmp.eq.s32.totalorder %s43, 3
      %p297 = por %p295, %p296
      %p298 = scmp.ne.s32.totalorder %s287, %s288
      %p299 = scmp.eq.s32.totalorder %s43, 0
      %p300 = por %p298, %p299
      %p301 = scmp.ne.s32.totalorder %s287, %s288
      %p302 = scmp.eq.s32.totalorder %s44, 3
      %p303 = por %p301, %p302
      %p305 = scmp.ne.s32.totalorder %s288, %s304
      %p306 = scmp.eq.s32.totalorder %s44, 0
      %p307 = por %p305, %p306
      %s308 = ssub.s32 %s46, %s53
      %p309 = scmp.eq.s32.totalorder %s308, 0
      %s311 = sadd.s32 %s310, 1
      %s312 = scalar_select %p309, %s310, %s311
      %p315 = pneg %p309
      %p316 = scmp.eq.s32.totalorder %s38, 3
      %p317 = por %p315, %p316
      %p318 = scmp.ne.s32.totalorder %s310, %s313
      %p319 = scmp.eq.s32.totalorder %s38, 0
      %p320 = por %p318, %p319
      %p321 = scmp.ne.s32.totalorder %s310, %s313
      %p322 = scmp.eq.s32.totalorder %s43, 3
      %p323 = por %p321, %p322
      %p324 = scmp.ne.s32.totalorder %s313, %s314
      %p325 = scmp.eq.s32.totalorder %s43, 0
      %p326 = por %p324, %p325
      %p327 = scmp.ne.s32.totalorder %s313, %s314
      %p328 = scmp.eq.s32.totalorder %s44, 3
      %p329 = por %p327, %p328
      %p331 = scmp.ne.s32.totalorder %s314, %s330
      %p332 = scmp.eq.s32.totalorder %s44, 0
      %p333 = por %p331, %p332
      %s334 = ssub.s32 %s46, %s53
      %p335 = scmp.eq.s32.totalorder %s334, 0
      %s337 = sadd.s32 %s336, 1
      %s338 = scalar_select %p335, %s336, %s337
      %p341 = pneg %p335
      %p342 = scmp.eq.s32.totalorder %s38, 3
      %p343 = por %p341, %p342
      %p344 = scmp.ne.s32.totalorder %s336, %s339
      %p345 = scmp.eq.s32.totalorder %s38, 0
      %p346 = por %p344, %p345
      %p347 = scmp.ne.s32.totalorder %s336, %s339
      %p348 = scmp.eq.s32.totalorder %s43, 3
      %p349 = por %p347, %p348
      %p350 = scmp.ne.s32.totalorder %s339, %s340
      %p351 = scmp.eq.s32.totalorder %s43, 0
      %p352 = por %p350, %p351
      %p353 = scmp.ne.s32.totalorder %s339, %s340
      %p354 = scmp.eq.s32.totalorder %s44, 3
      %p355 = por %p353, %p354
      %p357 = scmp.ne.s32.totalorder %s340, %s356
      %p358 = scmp.eq.s32.totalorder %s44, 0
      %p359 = por %p357, %p358
      %s360 = ssub.s32 %s46, %s53
      %p361 = scmp.eq.s32.totalorder %s360, 0
      %s363 = sadd.s32 %s362, 1
      %s364 = scalar_select %p361, %s362, %s363
      %p367 = pneg %p361
      %p368 = scmp.eq.s32.totalorder %s38, 3
      %p369 = por %p367, %p368
      %p370 = scmp.ne.s32.totalorder %s362, %s365
      %p371 = scmp.eq.s32.totalorder %s38, 0
      %p372 = por %p370, %p371
      %p373 = scmp.ne.s32.totalorder %s362, %s365
      %p374 = scmp.eq.s32.totalorder %s43, 3
      %p375 = por %p373, %p374
      %p376 = scmp.ne.s32.totalorder %s365, %s366
      %p377 = scmp.eq.s32.totalorder %s43, 0
      %p378 = por %p376, %p377
      %p379 = scmp.ne.s32.totalorder %s365, %s366
      %p380 = scmp.eq.s32.totalorder %s44, 3
      %p381 = por %p379, %p380
      %p383 = scmp.ne.s32.totalorder %s366, %s382
      %p384 = scmp.eq.s32.totalorder %s44, 0
      %p385 = por %p383, %p384
      %s386 = ssub.s32 %s46, %s53
      %p387 = scmp.eq.s32.totalorder %s386, 0
      %s389 = sadd.s32 %s388, 1
      %s390 = scalar_select %p387, %s388, %s389
      %p393 = pneg %p387
      %p394 = scmp.eq.s32.totalorder %s38, 3
      %p395 = por %p393, %p394
      %p396 = scmp.ne.s32.totalorder %s388, %s391
      %p397 = scmp.eq.s32.totalorder %s38, 0
      %p398 = por %p396, %p397
      %p399 = scmp.ne.s32.totalorder %s388, %s391
      %p400 = scmp.eq.s32.totalorder %s43, 3
      %p401 = por %p399, %p400
      %p402 = scmp.ne.s32.totalorder %s391, %s392
      %p403 = scmp.eq.s32.totalorder %s43, 0
      %p404 = por %p402, %p403
      %p405 = scmp.ne.s32.totalorder %s391, %s392
      %p406 = scmp.eq.s32.totalorder %s44, 3
      %p407 = por %p405, %p406
      %p409 = scmp.ne.s32.totalorder %s392, %s408
      %p410 = scmp.eq.s32.totalorder %s44, 0
      %p411 = por %p409, %p410
      %s412 = ssub.s32 %s46, %s53
      %p413 = scmp.eq.s32.totalorder %s412, 0
      %s415 = sadd.s32 %s414, 1
      %s416 = scalar_select %p413, %s414, %s415
      %p419 = pneg %p413
      %p420 = scmp.eq.s32.totalorder %s38, 3
      %p421 = por %p419, %p420
      %p422 = scmp.ne.s32.totalorder %s414, %s417
      %p423 = scmp.eq.s32.totalorder %s38, 0
      %p424 = por %p422, %p423
      %p425 = scmp.ne.s32.totalorder %s414, %s417
      %p426 = scmp.eq.s32.totalorder %s43, 3
      %p427 = por %p425, %p426
      %p428 = scmp.ne.s32.totalorder %s417, %s418
      %p429 = scmp.eq.s32.totalorder %s43, 0
      %p430 = por %p428, %p429
      %p431 = scmp.ne.s32.totalorder %s417, %s418
      %p432 = scmp.eq.s32.totalorder %s44, 3
      %p433 = por %p431, %p432
      %p435 = scmp.ne.s32.totalorder %s418, %s434
      %p436 = scmp.eq.s32.totalorder %s44, 0
      %p437 = por %p435, %p436
      %s438 = ssub.s32 %s46, %s53
      %p439 = scmp.eq.s32.totalorder %s438, 0
      %s441 = sadd.s32 %s440, 1
      %s442 = scalar_select %p439, %s440, %s441
      %p445 = pneg %p439
      %p446 = scmp.eq.s32.totalorder %s38, 3
      %p447 = por %p445, %p446
      %p448 = scmp.ne.s32.totalorder %s440, %s443
      %p449 = scmp.eq.s32.totalorder %s38, 0
      %p450 = por %p448, %p449
      %p451 = scmp.ne.s32.totalorder %s440, %s443
      %p452 = scmp.eq.s32.totalorder %s43, 3
      %p453 = por %p451, %p452
      %p454 = scmp.ne.s32.totalorder %s443, %s444
      %p455 = scmp.eq.s32.totalorder %s43, 0
      %p456 = por %p454, %p455
      %p457 = scmp.ne.s32.totalorder %s443, %s444
      %p458 = scmp.eq.s32.totalorder %s44, 3
      %p459 = por %p457, %p458
      %p461 = scmp.ne.s32.totalorder %s444, %s460
      %p462 = scmp.eq.s32.totalorder %s44, 0
      %p463 = por %p461, %p462
      %s465 = sadd.s32 %s464, 1
      %p468 = scmp.eq.s32.totalorder %s38, 3
      %p469 = scmp.ne.s32.totalorder %s464, %s466
      %p470 = scmp.eq.s32.totalorder %s38, 0
      %p471 = por %p469, %p470
      %p472 = scmp.ne.s32.totalorder %s464, %s466
      %p473 = scmp.eq.s32.totalorder %s43, 3
      %p474 = por %p472, %p473
      %p475 = scmp.ne.s32.totalorder %s466, %s467
      %p476 = scmp.eq.s32.totalorder %s43, 0
      %p477 = por %p475, %p476
      %p478 = scmp.ne.s32.totalorder %s466, %s467
      %p479 = scmp.eq.s32.totalorder %s44, 3
      %p480 = por %p478, %p479
      %p482 = scmp.ne.s32.totalorder %s467, %s481
      %p483 = scmp.eq.s32.totalorder %s44, 0
      %p484 = por %p482, %p483
      %s486 = sadd.s32 %s485, 1
      %p489 = scmp.eq.s32.totalorder %s38, 3
      %p490 = scmp.ne.s32.totalorder %s485, %s487
      %p491 = scmp.eq.s32.totalorder %s38, 0
      %p492 = por %p490, %p491
      %p493 = scmp.ne.s32.totalorder %s485, %s487
      %p494 = scmp.eq.s32.totalorder %s43, 3
      %p495 = por %p493, %p494
      %p496 = scmp.ne.s32.totalorder %s487, %s488
      %p497 = scmp.eq.s32.totalorder %s43, 0
      %p498 = por %p496, %p497
      %p499 = scmp.ne.s32.totalorder %s487, %s488
      %p500 = scmp.eq.s32.totalorder %s44, 3
      %p501 = por %p499, %p500
      %p503 = scmp.ne.s32.totalorder %s488, %s502
      %p504 = scmp.eq.s32.totalorder %s44, 0
      %p505 = por %p503, %p504
      %s507 = sadd.s32 %s506, 1
      %p510 = scmp.eq.s32.totalorder %s38, 3
      %p511 = scmp.ne.s32.totalorder %s506, %s508
      %p512 = scmp.eq.s32.totalorder %s38, 0
      %p513 = por %p511, %p512
      %p514 = scmp.ne.s32.totalorder %s506, %s508
      %p515 = scmp.eq.s32.totalorder %s43, 3
      %p516 = por %p514, %p515
      %p517 = scmp.ne.s32.totalorder %s508, %s509
      %p518 = scmp.eq.s32.totalorder %s43, 0
      %p519 = por %p517, %p518
      %p520 = scmp.ne.s32.totalorder %s508, %s509
      %p521 = scmp.eq.s32.totalorder %s44, 3
      %p522 = por %p520, %p521
      %p524 = scmp.ne.s32.totalorder %s509, %s523
      %p525 = scmp.eq.s32.totalorder %s44, 0
      %p526 = por %p524, %p525
      %s528 = sadd.s32 %s527, 1
      %p531 = scmp.eq.s32.totalorder %s38, 3
      %p532 = scmp.ne.s32.totalorder %s527, %s529
      %p533 = scmp.eq.s32.totalorder %s38, 0
      %p534 = por %p532, %p533
      %p535 = scmp.ne.s32.totalorder %s527, %s529
      %p536 = scmp.eq.s32.totalorder %s43, 3
      %p537 = por %p535, %p536
      %p538 = scmp.ne.s32.totalorder %s529, %s530
      %p539 = scmp.eq.s32.totalorder %s43, 0
      %p540 = por %p538, %p539
      %p541 = scmp.ne.s32.totalorder %s529, %s530
      %p542 = scmp.eq.s32.totalorder %s44, 3
      %p543 = por %p541, %p542
      %p545 = scmp.ne.s32.totalorder %s530, %s544
      %p546 = scmp.eq.s32.totalorder %s44, 0
      %p547 = por %p545, %p546
      %s548 = ssub.s32 %s45, %s57
      %p549 = scmp.eq.s32.totalorder %s548, 0
      %s551 = sadd.s32 %s550, 1
      %s552 = scalar_select %p549, %s550, %s551
      %p555 = pneg %p549
      %p556 = scmp.eq.s32.totalorder %s38, 3
      %p557 = por %p555, %p556
      %p558 = scmp.ne.s32.totalorder %s550, %s553
      %p559 = scmp.eq.s32.totalorder %s38, 0
      %p560 = por %p558, %p559
      %p561 = scmp.ne.s32.totalorder %s550, %s553
      %p562 = scmp.eq.s32.totalorder %s43, 3
      %p563 = por %p561, %p562
      %p564 = scmp.ne.s32.totalorder %s553, %s554
      %p565 = scmp.eq.s32.totalorder %s43, 0
      %p566 = por %p564, %p565
      %p567 = scmp.ne.s32.totalorder %s553, %s554
      %p568 = scmp.eq.s32.totalorder %s44, 3
      %p569 = por %p567, %p568
      %p571 = scmp.ne.s32.totalorder %s554, %s570
      %p572 = scmp.eq.s32.totalorder %s44, 0
      %p573 = por %p571, %p572
      %s574 = ssub.s32 %s45, %s57
      %p575 = scmp.eq.s32.totalorder %s574, 0
      %s577 = sadd.s32 %s576, 1
      %s578 = scalar_select %p575, %s576, %s577
      %p581 = pneg %p575
      %p582 = scmp.eq.s32.totalorder %s38, 3
      %p583 = por %p581, %p582
      %p584 = scmp.ne.s32.totalorder %s576, %s579
      %p585 = scmp.eq.s32.totalorder %s38, 0
      %p586 = por %p584, %p585
      %p587 = scmp.ne.s32.totalorder %s576, %s579
      %p588 = scmp.eq.s32.totalorder %s43, 3
      %p589 = por %p587, %p588
      %p590 = scmp.ne.s32.totalorder %s579, %s580
      %p591 = scmp.eq.s32.totalorder %s43, 0
      %p592 = por %p590, %p591
      %p593 = scmp.ne.s32.totalorder %s579, %s580
      %p594 = scmp.eq.s32.totalorder %s44, 3
      %p595 = por %p593, %p594
      %p597 = scmp.ne.s32.totalorder %s580, %s596
      %p598 = scmp.eq.s32.totalorder %s44, 0
      %p599 = por %p597, %p598
      %s600 = ssub.s32 %s45, %s57
      %p601 = scmp.eq.s32.totalorder %s600, 0
      %s603 = sadd.s32 %s602, 1
      %s604 = scalar_select %p601, %s602, %s603
      %p607 = pneg %p601
      %p608 = scmp.eq.s32.totalorder %s38, 3
      %p609 = por %p607, %p608
      %p610 = scmp.ne.s32.totalorder %s602, %s605
      %p611 = scmp.eq.s32.totalorder %s38, 0
      %p612 = por %p610, %p611
      %p613 = scmp.ne.s32.totalorder %s602, %s605
      %p614 = scmp.eq.s32.totalorder %s43, 3
      %p615 = por %p613, %p614
      %p616 = scmp.ne.s32.totalorder %s605, %s606
      %p617 = scmp.eq.s32.totalorder %s43, 0
      %p618 = por %p616, %p617
      %p619 = scmp.ne.s32.totalorder %s605, %s606
      %p620 = scmp.eq.s32.totalorder %s44, 3
      %p621 = por %p619, %p620
      %p623 = scmp.ne.s32.totalorder %s606, %s622
      %p624 = scmp.eq.s32.totalorder %s44, 0
      %p625 = por %p623, %p624
      %p626 = scmp.le.s32.totalorder 1, %s38
      %p627 = scmp.lt.s32.totalorder %s38, 5
      %p628 = pnand %p626, %p627
      %p629 = pneg %p628
      // Predicated region
      $region9: #{text_model_forward.1} parent=5 // pred_check
        _
      $region10: #{text_model_forward.1} parent=5 // pred_check_branch
        %631 = sbr.rel (%p628) target = $region12
      $region11: #{text_model_forward.1} parent=5 // pred_region
        %s632 = ssub.s32 %s38, 1
        // Predicated region
        $region13: #{text_model_forward.1} parent=11 // pred_check
          %p633 = pneg %p123
        $region14: #{text_model_forward.1} parent=11 // pred_check_branch
          %635 = sbr.rel (%p633) target = $region16
        $region15: #{text_model_forward.1} parent=11 // pred_region
          _
        $region16: #{text_model_forward.1} parent=11 // pred_fallthru
          _
        // Predicated region
        $region17: #{text_model_forward.1} parent=11 // pred_check
          %p636 = pneg %p144
        $region18: #{text_model_forward.1} parent=11 // pred_check_branch
          %638 = sbr.rel (%p636) target = $region20
        $region19: #{text_model_forward.1} parent=11 // pred_region
          _
        $region20: #{text_model_forward.1} parent=11 // pred_fallthru
          _
        // Predicated region
        $region21: #{text_model_forward.1} parent=11 // pred_check
          %p639 = pneg %p477
        $region22: #{text_model_forward.1} parent=11 // pred_check_branch
          %641 = sbr.rel (%p639) target = $region24
        $region23: #{text_model_forward.1} parent=11 // pred_region
          _
        $region24: #{text_model_forward.1} parent=11 // pred_fallthru
          _
        // Predicated region
        $region25: #{text_model_forward.1} parent=11 // pred_check
          %p642 = pneg %p498
        $region26: #{text_model_forward.1} parent=11 // pred_check_branch
          %644 = sbr.rel (%p642) target = $region28
        $region27: #{text_model_forward.1} parent=11 // pred_region
          _
        $region28: #{text_model_forward.1} parent=11 // pred_fallthru
          _
        // Predicated region
        $region29: #{text_model_forward.1} parent=11 // pred_check
          %p645 = pneg %p519
        $region30: #{text_model_forward.1} parent=11 // pred_check_branch
          %647 = sbr.rel (%p645) target = $region32
        $region31: #{text_model_forward.1} parent=11 // pred_region
          _
        $region32: #{text_model_forward.1} parent=11 // pred_fallthru
          _
        // Predicated region
        $region33: #{text_model_forward.1} parent=11 // pred_check
          %p648 = pneg %p540
        $region34: #{text_model_forward.1} parent=11 // pred_check_branch
          %650 = sbr.rel (%p648) target = $region36
        $region35: #{text_model_forward.1} parent=11 // pred_region
          _
        $region36: #{text_model_forward.1} parent=11 // pred_fallthru
          _
      $region12: #{text_model_forward.1} parent=5 // pred_fallthru
        _
      %p651 = scmp.lt.s32.totalorder %s38, 4
      // Predicated region
      $region37: #{text_model_forward.1} parent=5 // pred_check
        %p652 = pneg %p651
      $region38: #{text_model_forward.1} parent=5 // pred_check_branch
        %654 = sbr.rel (%p652) target = $region40
      $region39: #{text_model_forward.1} parent=5 // pred_region
        // Predicated region
        $region41: #{text_model_forward.1} parent=39 // pred_check
          %p655 = pneg %p70
        $region42: #{text_model_forward.1} parent=39 // pred_check_branch
          %657 = sbr.rel (%p655) target = $region44
        $region43: #{text_model_forward.1} parent=39 // pred_region
          %p658 = scmp.lt.s32.totalorder %s45, 1
          %s659 = scalar_select %p658, %s45, 1
          %s660 = smul.addr %s659, 2
          %s661 = smul.addr %s660, 8
          %s662 = scalar_lea.vmem %s0, %s661
        $region44: #{text_model_forward.1} parent=39 // pred_fallthru
          _
        // Predicated region
        $region45: #{text_model_forward.1} parent=39 // pred_check
          %p663 = pneg %p96
        $region46: #{text_model_forward.1} parent=39 // pred_check_branch
          %665 = sbr.rel (%p663) target = $region48
        $region47: #{text_model_forward.1} parent=39 // pred_region
          %p666 = scmp.lt.s32.totalorder %s45, 1
          %s667 = scalar_select %p666, %s45, 1
          %s668 = scalar_lea.vmem %s1, %s667
        $region48: #{text_model_forward.1} parent=39 // pred_fallthru
          _
        // Predicated region
        $region49: #{text_model_forward.1} parent=39 // pred_check
          %p669 = pneg %p164
        $region50: #{text_model_forward.1} parent=39 // pred_check_branch
          %671 = sbr.rel (%p669) target = $region52
        $region51: #{text_model_forward.1} parent=39 // pred_region
          %p672 = scmp.lt.s32.totalorder %s46, 1
          %s673 = scalar_select %p672, %s46, 1
          %s674 = smul.addr %s673, 48
          %s675 = smul.addr %s674, 4
          %s676 = scalar_lea.vmem %s4, %s675
        $region52: #{text_model_forward.1} parent=39 // pred_fallthru
          _
        // Predicated region
        $region53: #{text_model_forward.1} parent=39 // pred_check
          %p677 = pneg %p190
        $region54: #{text_model_forward.1} parent=39 // pred_check_branch
          %679 = sbr.rel (%p677) target = $region56
        $region55: #{text_model_forward.1} parent=39 // pred_region
          %p680 = scmp.lt.s32.totalorder %s46, 1
          %s681 = scalar_select %p680, %s46, 1
          %s682 = smul.addr %s681, 3
          %s683 = scalar_lea.vmem %s5, %s682
        $region56: #{text_model_forward.1} parent=39 // pred_fallthru
          _
        // Predicated region
        $region57: #{text_model_forward.1} parent=39 // pred_check
          %p684 = pneg %p216
        $region58: #{text_model_forward.1} parent=39 // pred_check_branch
          %686 = sbr.rel (%p684) target = $region60
        $region59: #{text_model_forward.1} parent=39 // pred_region
          %p687 = scmp.lt.s32.totalorder %s46, 1
          %s688 = scalar_select %p687, %s46, 1
          %s689 = smul.addr %s688, 16
          %s690 = smul.addr %s689, 4
          %s691 = scalar_lea.vmem %s6, %s690
        $region60: #{text_model_forward.1} parent=39 // pred_fallthru
          _
        // Predicated region
        $region61: #{text_model_forward.1} parent=39 // pred_check
          %p692 = pneg %p242
        $region62: #{text_model_forward.1} parent=39 // pred_check_branch
          %694 = sbr.rel (%p692) target = $region64
        $region63: #{text_model_forward.1} parent=39 // pred_region
          %p695 = scmp.lt.s32.totalorder %s46, 1
          %s696 = scalar_select %p695, %s46, 1
          %s697 = scalar_lea.vmem %s7, %s696
        $region64: #{text_model_forward.1} parent=39 // pred_fallthru
          _
        // Predicated region
        $region65: #{text_model_forward.1} parent=39 // pred_check
          %p698 = pneg %p268
        $region66: #{text_model_forward.1} parent=39 // pred_check_branch
          %700 = sbr.rel (%p698) target = $region68
        $region67: #{text_model_forward.1} parent=39 // pred_region
          %p701 = scmp.lt.s32.totalorder %s46, 1
          %s702 = scalar_select %p701, %s46, 1
          %s703 = scalar_lea.vmem %s8, %s702
        $region68: #{text_model_forward.1} parent=39 // pred_fallthru
          _
        // Predicated region
        $region69: #{text_model_forward.1} parent=39 // pred_check
          %p704 = pneg %p294
        $region70: #{text_model_forward.1} parent=39 // pred_check_branch
          %706 = sbr.rel (%p704) target = $region72
        $region71: #{text_model_forward.1} parent=39 // pred_region
          %p707 = scmp.lt.s32.totalorder %s46, 1
          %s708 = scalar_select %p707, %s46, 1
          %s709 = scalar_lea.vmem %s9, %s708
        $region72: #{text_model_forward.1} parent=39 // pred_fallthru
          _
        // Predicated region
        $region73: #{text_model_forward.1} parent=39 // pred_check
          %p710 = pneg %p320
        $region74: #{text_model_forward.1} parent=39 // pred_check_branch
          %712 = sbr.rel (%p710) target = $region76
        $region75: #{text_model_forward.1} parent=39 // pred_region
          %s713 = sand.u32 %s310, 1
          %s714 = scalar_lea.sflag [#allocation5], %s713
          %s715 = sand.u32 %s310, 1
          %s716 = smul.addr %s715, 128
          %s717 = scalar_lea.vmem [#allocation4], %s716
          %719 = vsyncadd %s714, 0
          %s720 = smul.addr %s46, 32
          %s721 = smul.addr %s720, 4
          %s722 = scalar_lea.hbm %s10, %s721
          %s723 = sshll.u32 %s722, 4
          %s724 = int_to_ptr.hbm [resolvable:$true] %s723
          %s725 = sshll.u32 %s717, 4
          %s726 = int_to_ptr.vmem [resolvable:$true] %s725
          %731 = dma.hbm_to_vmem [thread:$0]  %s724, 2048, %s726, %s714, 128, 128, 8
        $region76: #{text_model_forward.1} parent=39 // pred_fallthru
          _
        // Predicated region
        $region77: #{text_model_forward.1} parent=39 // pred_check
          %p732 = pneg %p346
        $region78: #{text_model_forward.1} parent=39 // pred_check_branch
          %734 = sbr.rel (%p732) target = $region80
        $region79: #{text_model_forward.1} parent=39 // pred_region
          %p735 = scmp.lt.s32.totalorder %s46, 1
          %s736 = scalar_select %p735, %s46, 1
          %s737 = smul.addr %s736, 2
          %s738 = scalar_lea.vmem %s11, %s737
        $region80: #{text_model_forward.1} parent=39 // pred_fallthru
          _
        // Predicated region
        $region81: #{text_model_forward.1} parent=39 // pred_check
          %p739 = pneg %p372
        $region82: #{text_model_forward.1} parent=39 // pred_check_branch
          %741 = sbr.rel (%p739) target = $region84
        $region83: #{text_model_forward.1} parent=39 // pred_region
          %s742 = sand.u32 %s362, 1
          %s743 = scalar_lea.sflag [#allocation8], %s742
          %s744 = sand.u32 %s362, 1
          %s745 = smul.addr %s744, 128
          %s746 = scalar_lea.vmem [#allocation7], %s745
          %748 = vsyncadd %s743, 0
          %s749 = smul.addr %s46, 32
          %s750 = smul.addr %s749, 4
          %s751 = scalar_lea.hbm %s12, %s750
          %s752 = sshll.u32 %s751, 4
          %s753 = int_to_ptr.hbm [resolvable:$true] %s752
          %s754 = sshll.u32 %s746, 4
          %s755 = int_to_ptr.vmem [resolvable:$true] %s754
          %760 = dma.hbm_to_vmem [thread:$0]  %s753, 2048, %s755, %s743, 64, 64, 4
        $region84: #{text_model_forward.1} parent=39 // pred_fallthru
          _
        // Predicated region
        $region85: #{text_model_forward.1} parent=39 // pred_check
          %p761 = pneg %p398
        $region86: #{text_model_forward.1} parent=39 // pred_check_branch
          %763 = sbr.rel (%p761) target = $region88
        $region87: #{text_model_forward.1} parent=39 // pred_region
          %p764 = scmp.lt.s32.totalorder %s46, 1
          %s765 = scalar_select %p764, %s46, 1
          %s766 = scalar_lea.vmem %s13, %s765
        $region88: #{text_model_forward.1} parent=39 // pred_fallthru
          _
        // Predicated region
        $region89: #{text_model_forward.1} parent=39 // pred_check
          %p767 = pneg %p424
        $region90: #{text_model_forward.1} parent=39 // pred_check_branch
          %769 = sbr.rel (%p767) target = $region92
        $region91: #{text_model_forward.1} parent=39 // pred_region
          %p770 = scmp.lt.s32.totalorder %s46, 1
          %s771 = scalar_select %p770, %s46, 1
          %s772 = scalar_lea.vmem %s14, %s771
        $region92: #{text_model_forward.1} parent=39 // pred_fallthru
          _
        // Predicated region
        $region93: #{text_model_forward.1} parent=39 // pred_check
          %p773 = pneg %p450
        $region94: #{text_model_forward.1} parent=39 // pred_check_branch
          %775 = sbr.rel (%p773) target = $region96
        $region95: #{text_model_forward.1} parent=39 // pred_region
          %p776 = scmp.lt.s32.totalorder %s46, 1
          %s777 = scalar_select %p776, %s46, 1
          %s778 = scalar_lea.vmem %s15, %s777
        $region96: #{text_model_forward.1} parent=39 // pred_fallthru
          _
        // Predicated region
        $region97: #{text_model_forward.1} parent=39 // pred_check
          %p779 = pneg %p560
        $region98: #{text_model_forward.1} parent=39 // pred_check_branch
          %781 = sbr.rel (%p779) target = $region100
        $region99: #{text_model_forward.1} parent=39 // pred_region
          %p782 = scmp.lt.s32.totalorder %s45, 1
          %s783 = scalar_select %p782, %s45, 1
          %s784 = scalar_lea.vmem %s20, %s783
        $region100: #{text_model_forward.1} parent=39 // pred_fallthru
          _
      $region40: #{text_model_forward.1} parent=5 // pred_fallthru
        _
      %p785 = scmp.le.s32.totalorder 1, %s38
      %p786 = scmp.lt.s32.totalorder %s38, 5
      %p787 = pnand %p785, %p786
      %p788 = pneg %p787
      // Predicated region
      $region101: #{text_model_forward.1} parent=5 // pred_check
        _
      $region102: #{text_model_forward.1} parent=5 // pred_check_branch
        %790 = sbr.rel (%p787) target = $region104
      $region103: #{text_model_forward.1} parent=5 // pred_region
        %s791 = ssub.s32 %s38, 1
        %s792 = sand.u32 %s313, 1
        %s793 = scalar_lea.sflag [#allocation5], %s792
        %s794 = sand.u32 %s313, 1
        %s795 = smul.addr %s794, 128
        %s796 = scalar_lea.vmem [#allocation4], %s795
        // Predicated region
        $region105: #{text_model_forward.1} parent=103 // pred_check
          %p797 = pneg %p326
        $region106: #{text_model_forward.1} parent=103 // pred_check_branch
          %799 = sbr.rel (%p797) target = $region108
        $region107: #{text_model_forward.1} parent=103 // pred_region
          %801 = dma.done %s793, 2048
        $region108: #{text_model_forward.1} parent=103 // pred_fallthru
          _
        %s802 = sand.u32 %s365, 1
        %s803 = scalar_lea.sflag [#allocation8], %s802
        %s804 = sand.u32 %s365, 1
        %s805 = smul.addr %s804, 128
        %s806 = scalar_lea.vmem [#allocation7], %s805
        // Predicated region
        $region109: #{text_model_forward.1} parent=103 // pred_check
          %p807 = pneg %p378
        $region110: #{text_model_forward.1} parent=103 // pred_check_branch
          %809 = sbr.rel (%p807) target = $region112
        $region111: #{text_model_forward.1} parent=103 // pred_region
          %811 = dma.done %s803, 2048
        $region112: #{text_model_forward.1} parent=103 // pred_fallthru
          _
        %p812 = scmp.lt.s32.totalorder %s47, 1
        %s813 = scalar_select %p812, %s47, 1
        %s814 = smul.addr %s813, 2
        %s815 = smul.addr %s814, 8
        %s816 = scalar_lea.vmem %s0, %s815
        %p817 = pneg %p76
        %p818 = pneg %p73
        %p819 = scmp.lt.s32.totalorder %s47, 1
        %s820 = scalar_select %p819, %s47, 1
        %s821 = scalar_lea.vmem %s1, %s820
        %p822 = pneg %p102
        %p823 = pneg %p99
        %p824 = pneg %p123
        %p825 = pneg %p120
        %p826 = pneg %p144
        %p827 = pneg %p141
        %p828 = scmp.lt.s32.totalorder %s48, 1
        %s829 = scalar_select %p828, %s48, 1
        %s830 = smul.addr %s829, 48
        %s831 = smul.addr %s830, 4
        %s832 = scalar_lea.vmem %s4, %s831
        %p833 = pneg %p170
        %p834 = pneg %p167
        %p835 = scmp.lt.s32.totalorder %s48, 1
        %s836 = scalar_select %p835, %s48, 1
        %s837 = smul.addr %s836, 3
        %s838 = scalar_lea.vmem %s5, %s837
        %p839 = pneg %p196
        %p840 = pneg %p193
        %p841 = scmp.lt.s32.totalorder %s48, 1
        %s842 = scalar_select %p841, %s48, 1
        %s843 = smul.addr %s842, 16
        %s844 = smul.addr %s843, 4
        %s845 = scalar_lea.vmem %s6, %s844
        %p846 = pneg %p222
        %p847 = pneg %p219
        %p848 = scmp.lt.s32.totalorder %s48, 1
        %s849 = scalar_select %p848, %s48, 1
        %s850 = scalar_lea.vmem %s7, %s849
        %p851 = pneg %p248
        %p852 = pneg %p245
        %p853 = scmp.lt.s32.totalorder %s48, 1
        %s854 = scalar_select %p853, %s48, 1
        %s855 = scalar_lea.vmem %s8, %s854
        %p856 = pneg %p274
        %p857 = pneg %p271
        %p858 = scmp.lt.s32.totalorder %s48, 1
        %s859 = scalar_select %p858, %s48, 1
        %s860 = scalar_lea.vmem %s9, %s859
        %p861 = pneg %p300
        %p862 = pneg %p297
        %s863 = sand.u32 %s313, 1
        %s864 = scalar_lea.sflag [#allocation5], %s863
        %s865 = sand.u32 %s313, 1
        %s866 = smul.addr %s865, 128
        %s867 = scalar_lea.vmem [#allocation4], %s866
        %p868 = pneg %p326
        %p869 = pneg %p323
        %p870 = scmp.lt.s32.totalorder %s48, 1
        %s871 = scalar_select %p870, %s48, 1
        %s872 = smul.addr %s871, 2
        %s873 = scalar_lea.vmem %s11, %s872
        %p874 = pneg %p352
        %p875 = pneg %p349
        %s876 = sand.u32 %s365, 1
        %s877 = scalar_lea.sflag [#allocation8], %s876
        %s878 = sand.u32 %s365, 1
        %s879 = smul.addr %s878, 128
        %s880 = scalar_lea.vmem [#allocation7], %s879
        %p881 = pneg %p378
        %p882 = pneg %p375
        %p883 = scmp.lt.s32.totalorder %s48, 1
        %s884 = scalar_select %p883, %s48, 1
        %s885 = scalar_lea.vmem %s13, %s884
        %p886 = pneg %p404
        %p887 = pneg %p401
        %p888 = scmp.lt.s32.totalorder %s48, 1
        %s889 = scalar_select %p888, %s48, 1
        %s890 = scalar_lea.vmem %s14, %s889
        %p891 = pneg %p430
        %p892 = pneg %p427
        %p893 = scmp.lt.s32.totalorder %s48, 1
        %s894 = scalar_select %p893, %s48, 1
        %s895 = scalar_lea.vmem %s15, %s894
        %p896 = pneg %p456
        %p897 = pneg %p453
        %p898 = pneg %p477
        %p899 = pneg %p474
        %p900 = pneg %p498
        %p901 = pneg %p495
        %p902 = pneg %p519
        %p903 = pneg %p516
        %p904 = pneg %p540
        %p905 = pneg %p537
        %p906 = scmp.lt.s32.totalorder %s47, 1
        %s907 = scalar_select %p906, %s47, 1
        %s908 = scalar_lea.vmem %s20, %s907
        %p909 = pneg %p566
        %p910 = pneg %p563
        %p911 = pneg %p592
        %p912 = pneg %p589
        %s913 = sand.u32 %s579, 1
        %s914 = scalar_lea.sflag [#allocation6], %s913
        %s915 = sand.u32 %s579, 1
        %s916 = scalar_lea.vmem [#allocation9], %s915
        %p917 = pneg %p618
        %p918 = pneg %p615
        %p919 = scmp.lt.s32.totalorder %s47, 1
        %s920 = scalar_select %p919, %s47, 1
        %s921 = scalar_lea.vmem %s22, %s920
        %p922 = scmp.lt.s32.totalorder %s47, 1
        %s923 = scalar_select %p922, %s47, 1
        %s924 = smul.addr %s923, 2
        %s925 = smul.addr %s924, 8
        %s926 = scalar_lea.vmem %s0, %s925
        %p927 = scmp.lt.s32.totalorder %s47, 1
        %s928 = scalar_select %p927, %s47, 1
        %s929 = scalar_lea.vmem %s1, %s928
        %p930 = scmp.lt.s32.totalorder %s48, 1
        %s931 = scalar_select %p930, %s48, 1
        %s932 = smul.addr %s931, 48
        %s933 = smul.addr %s932, 4
        %s934 = scalar_lea.vmem %s4, %s933
        %p935 = scmp.lt.s32.totalorder %s48, 1
        %s936 = scalar_select %p935, %s48, 1
        %s937 = smul.addr %s936, 3
        %s938 = scalar_lea.vmem %s5, %s937
        %p939 = scmp.lt.s32.totalorder %s48, 1
        %s940 = scalar_select %p939, %s48, 1
        %s941 = smul.addr %s940, 16
        %s942 = smul.addr %s941, 4
        %s943 = scalar_lea.vmem %s6, %s942
        %p944 = scmp.lt.s32.totalorder %s48, 1
        %s945 = scalar_select %p944, %s48, 1
        %s946 = scalar_lea.vmem %s7, %s945
        %p947 = scmp.lt.s32.totalorder %s48, 1
        %s948 = scalar_select %p947, %s48, 1
        %s949 = scalar_lea.vmem %s8, %s948
        %p950 = scmp.lt.s32.totalorder %s48, 1
        %s951 = scalar_select %p950, %s48, 1
        %s952 = scalar_lea.vmem %s9, %s951
        %p953 = scmp.lt.s32.totalorder %s48, 1
        %s954 = scalar_select %p953, %s48, 1
        %s955 = smul.addr %s954, 2
        %s956 = scalar_lea.vmem %s11, %s955
        %p957 = scmp.lt.s32.totalorder %s48, 1
        %s958 = scalar_select %p957, %s48, 1
        %s959 = scalar_lea.vmem %s13, %s958
        %p960 = scmp.lt.s32.totalorder %s48, 1
        %s961 = scalar_select %p960, %s48, 1
        %s962 = scalar_lea.vmem %s14, %s961
        %p963 = scmp.lt.s32.totalorder %s48, 1
        %s964 = scalar_select %p963, %s48, 1
        %s965 = scalar_lea.vmem %s15, %s964
        %p966 = scmp.lt.s32.totalorder %s47, 1
        %s967 = scalar_select %p966, %s47, 1
        %s968 = scalar_lea.vmem %s20, %s967
        %p969 = scmp.lt.s32.totalorder %s47, 1
        %s970 = scalar_select %p969, %s47, 1
        %s971 = scalar_lea.vmem %s22, %s970
        %p973 = scmp.eq.s32.totalorder %s48, 0
        // Predicated region
        $region113: #{text_model_forward.1} parent=103 // pred_check
          %p974 = pneg %p973
        $region114: #{text_model_forward.1} parent=103 // pred_check_branch
          %976 = sbr.rel (%p974) target = $region116
        $region115: #{text_model_forward.1} parent=103 // pred_region
          %v977 = vld [vmem:[%s926] sm:$0xff]
          %v978 = vld [vmem:[%s926 + $0x8] sm:$0xff]
          %v979 = vld [vmem:[%s2] sm:$0x1]
          %v980 = vld [vmem:[%s3] sm:$0x1]
          %981 = vadd.xlane.f32.xlu0 %v977
          %v982 = vpop.xlane.xlu0 %981
          %983 = vadd.xlane.f32.xlu0 %v978
          %v984 = vpop.xlane.xlu0 %983
          %v985 = vrcp.pop 128.0
          %v986 = vmul.f32 128.0, %v985
          %v987 = vsub.f32 1.0, %v986
          %v988 = vmul.f32 %v985, %v987
          %v989 = vadd.f32 %v985, %v988
          %vm990 = vweird.f32 %v985
          %v991 = vsel %vm990, %v985, %v989
          %v992 = vmul.f32 %v982, %v991
          %v993 = vmul.f32 %v984, %v991
          %v994 = vsub.f32 %v977, %v992
          %v995 = vsub.f32 %v978, %v993
          %v996 = vmul.f32 %v994, %v994
          %v997 = vmul.f32 %v995, %v995
          %998 = vadd.xlane.f32.xlu0 %v996
          %v999 = vpop.xlane.xlu0 %998
          %1000 = vadd.xlane.f32.xlu0 %v997
          %v1001 = vpop.xlane.xlu0 %1000
          %v1002 = vmul.f32 %v999, %v991
          %v1003 = vmul.f32 %v1001, %v991
          %v1004 = vadd.f32 %v1002, 1e-12
          %v1005 = vadd.f32 %v1003, 1e-12
          %v1006 = vrsqrt.pop %v1004
          %v1007 = vmul.f32 %v1006, %v1004
          %v1008 = vmul.f32 %v1007, %v1006
          %v1009 = vmul.f32 0.5, %v1008
          %v1010 = vsub.f32 1.5, %v1009
          %v1011 = vmul.f32 %v1006, %v1010
          %vm1012 = vweird.f32 %v1004
          %vm1013 = vweird.f32 %v1006
          %vm1014 = vmor %vm1012, %vm1013
          %v1015 = vsel %vm1014, %v1006, %v1011
          %v1016 = vrsqrt.pop %v1005
          %v1017 = vmul.f32 %v1016, %v1005
          %v1018 = vmul.f32 %v1017, %v1016
          %v1019 = vmul.f32 0.5, %v1018
          %v1020 = vsub.f32 1.5, %v1019
          %v1021 = vmul.f32 %v1016, %v1020
          %vm1022 = vweird.f32 %v1005
          %vm1023 = vweird.f32 %v1016
          %vm1024 = vmor %vm1022, %vm1023
          %v1025 = vsel %vm1024, %v1016, %v1021
          %v1026 = vmul.f32 %v994, %v1015
          %v1027 = vmul.f32 %v995, %v1025
          %v1029 = vperm.slane %v979, 0
          %v1031 = vmul.f32 %v1026, %v1029
          %v1032 = vmul.f32 %v1027, %v1029
          %v1034 = vperm.slane %v980, 0
          %v1036 = vadd.f32 %v1031, %v1034
          %v1037 = vadd.f32 %v1032, %v1034
          %1038 = vst [vmem:[#allocation2] sm:$0xff] %v1036
          %1039 = vst [vmem:[#allocation2 + $0x8] sm:$0xff] %v1037
        $region116: #{text_model_forward.1} parent=103 // pred_fallthru
          _
        %v1040 = vld [vmem:[#allocation2] sm:$0xff]
        %v1041 = vld [vmem:[#allocation2 + $0x8] sm:$0xff]
        %v1042 = vld [vmem:[%s929] sm:$0x1]
        %v1043 = vpack.c.bf16 %v1041, %v1040
        %v1044 = vld [vmem:[%s934] sm:$0xff]
        %v1045 = vld [vmem:[%s934 + $0x8] sm:$0xf]
        %v1046 = vld [vmem:[%s934 + $0xc] sm:$0xff]
        %v1047 = vld [vmem:[%s934 + $0x14] sm:$0xf]
        %v1048 = vld [vmem:[%s934 + $0x18] sm:$0xff]
        %v1049 = vld [vmem:[%s934 + $0x20] sm:$0xf]
        %v1050 = vld [vmem:[%s934 + $0x24] sm:$0xff]
        %v1051 = vld [vmem:[%s934 + $0x2c] sm:$0xf]
        %v1052 = vld [vmem:[%s934 + $0x30] sm:$0xff]
        %v1053 = vld [vmem:[%s934 + $0x38] sm:$0xf]
        %v1054 = vld [vmem:[%s934 + $0x3c] sm:$0xff]
        %v1055 = vld [vmem:[%s934 + $0x44] sm:$0xf]
        %v1056 = vld [vmem:[%s934 + $0x48] sm:$0xff]
        %v1057 = vld [vmem:[%s934 + $0x50] sm:$0xf]
        %v1058 = vld [vmem:[%s934 + $0x54] sm:$0xff]
        %v1059 = vld [vmem:[%s934 + $0x5c] sm:$0xf]
        %v1060 = vld [vmem:[%s934 + $0x60] sm:$0xff]
        %v1061 = vld [vmem:[%s934 + $0x68] sm:$0xf]
        %v1062 = vld [vmem:[%s934 + $0x6c] sm:$0xff]
        %v1063 = vld [vmem:[%s934 + $0x74] sm:$0xf]
        %v1064 = vld [vmem:[%s934 + $0x78] sm:$0xff]
        %v1065 = vld [vmem:[%s934 + $0x80] sm:$0xf]
        %v1066 = vld [vmem:[%s934 + $0x84] sm:$0xff]
        %v1067 = vld [vmem:[%s934 + $0x8c] sm:$0xf]
        %v1068 = vld [vmem:[%s934 + $0x90] sm:$0xff]
        %v1069 = vld [vmem:[%s934 + $0x98] sm:$0xf]
        %v1070 = vld [vmem:[%s934 + $0x9c] sm:$0xff]
        %v1071 = vld [vmem:[%s934 + $0xa4] sm:$0xf]
        %v1072 = vld [vmem:[%s934 + $0xa8] sm:$0xff]
        %v1073 = vld [vmem:[%s934 + $0xb0] sm:$0xf]
        %v1074 = vld [vmem:[%s934 + $0xb4] sm:$0xff]
        %v1075 = vld [vmem:[%s934 + $0xbc] sm:$0xf]
        %v1076 = vld [vmem:[%s938] sm:$0x7]
        %v1078 = vperm.slane %v1076, 0
        %v1079 = vperm.slane %v1076, 1
        %v1080 = vperm.slane %v1076, 2
        %v1116 = vunpack.c.l.b16 %v1044
        %v1117 = vunpack.c.h.b16 %v1044
        %v1118 = vunpack.c.l.b16 %v1045
        %v1119 = vunpack.c.l.b16 %v1046
        %v1120 = vunpack.c.h.b16 %v1046
        %v1121 = vunpack.c.l.b16 %v1047
        %v1122 = vunpack.c.l.b16 %v1048
        %v1123 = vunpack.c.h.b16 %v1048
        %v1124 = vunpack.c.l.b16 %v1049
        %v1125 = vunpack.c.l.b16 %v1050
        %v1126 = vunpack.c.h.b16 %v1050
        %v1127 = vunpack.c.l.b16 %v1051
        %v1128 = vunpack.c.l.b16 %v1052
        %v1129 = vunpack.c.h.b16 %v1052
        %v1130 = vunpack.c.l.b16 %v1053
        %v1131 = vunpack.c.l.b16 %v1054
        %v1132 = vunpack.c.h.b16 %v1054
        %v1133 = vunpack.c.l.b16 %v1055
        %v1134 = vunpack.c.l.b16 %v1056
        %v1135 = vunpack.c.h.b16 %v1056
        %v1136 = vunpack.c.l.b16 %v1057
        %v1137 = vunpack.c.l.b16 %v1058
        %v1138 = vunpack.c.h.b16 %v1058
        %v1139 = vunpack.c.l.b16 %v1059
        %v1140 = vunpack.c.l.b16 %v1060
        %v1141 = vunpack.c.h.b16 %v1060
        %v1142 = vunpack.c.l.b16 %v1061
        %v1143 = vunpack.c.l.b16 %v1062
        %v1144 = vunpack.c.h.b16 %v1062
        %v1145 = vunpack.c.l.b16 %v1063
        %v1146 = vunpack.c.l.b16 %v1064
        %v1147 = vunpack.c.h.b16 %v1064
        %v1148 = vunpack.c.l.b16 %v1065
        %v1149 = vunpack.c.l.b16 %v1066
        %v1150 = vunpack.c.h.b16 %v1066
        %v1151 = vunpack.c.l.b16 %v1067
        %v1152 = vunpack.c.l.b16 %v1068
        %v1153 = vunpack.c.h.b16 %v1068
        %v1154 = vunpack.c.l.b16 %v1069
        %v1155 = vunpack.c.l.b16 %v1070
        %v1156 = vunpack.c.h.b16 %v1070
        %v1157 = vunpack.c.l.b16 %v1071
        %v1158 = vunpack.c.l.b16 %v1072
        %v1159 = vunpack.c.h.b16 %v1072
        %v1160 = vunpack.c.l.b16 %v1073
        %v1161 = vunpack.c.l.b16 %v1074
        %v1162 = vunpack.c.h.b16 %v1074
        %v1163 = vunpack.c.l.b16 %v1075
        %v1164 = vpack.c.b16 %v1119, %v1116
        %v1165 = vpack.c.b16 %v1120, %v1117
        %v1166 = vpack.c.b16 %v1121, %v1118
        %v1167 = vpack.c.b16 %v1125, %v1122
        %v1168 = vpack.c.b16 %v1126, %v1123
        %v1169 = vpack.c.b16 %v1127, %v1124
        %v1170 = vpack.c.b16 %v1131, %v1128
        %v1171 = vpack.c.b16 %v1132, %v1129
        %v1172 = vpack.c.b16 %v1133, %v1130
        %v1173 = vpack.c.b16 %v1137, %v1134
        %v1174 = vpack.c.b16 %v1138, %v1135
        %v1175 = vpack.c.b16 %v1139, %v1136
        %v1176 = vpack.c.b16 %v1143, %v1140
        %v1177 = vpack.c.b16 %v1144, %v1141
        %v1178 = vpack.c.b16 %v1145, %v1142
        %v1179 = vpack.c.b16 %v1149, %v1146
        %v1180 = vpack.c.b16 %v1150, %v1147
        %v1181 = vpack.c.b16 %v1151, %v1148
        %v1182 = vpack.c.b16 %v1155, %v1152
        %v1183 = vpack.c.b16 %v1156, %v1153
        %v1184 = vpack.c.b16 %v1157, %v1154
        %v1185 = vpack.c.b16 %v1161, %v1158
        %v1186 = vpack.c.b16 %v1162, %v1159
        %v1187 = vpack.c.b16 %v1163, %v1160
        %1212 = vmatpush.bf16.msra.mxu0 %v1185
        %1213 = vmatpush.bf16.msra.mxu0 %v1182
        %1214 = vmatpush.bf16.msra.mxu0 %v1179
        %1215 = vmatpush.bf16.msra.mxu0 %v1176
        %1216 = vmatpush.bf16.msra.mxu0 %v1173
        %1217 = vmatpush.bf16.msra.mxu0 %v1170
        %1218 = vmatpush.bf16.msra.mxu0 %v1167
        %1219 = vmatpush.bf16.msra.mxu0 %v1164
        %1220 = vmatmul.bf16.gmra.mxu0 %v1043
        %v1221 = vpop.f32.mrf.mxu0
        %v1222 = vadd.f32 %v1078, %v1221
        %v1223 = vpop.f32.mrf.mxu0
        %v1224 = vadd.f32 %v1078, %v1223
        %1225 = vdwg.mxu0
        %1226 = vmatpush.bf16.msra.mxu0 %v1186
        %1227 = vmatpush.bf16.msra.mxu0 %v1183
        %1228 = vmatpush.bf16.msra.mxu0 %v1180
        %1229 = vmatpush.bf16.msra.mxu0 %v1177
        %1230 = vmatpush.bf16.msra.mxu0 %v1174
        %1231 = vmatpush.bf16.msra.mxu0 %v1171
        %1232 = vmatpush.bf16.msra.mxu0 %v1168
        %1233 = vmatpush.bf16.msra.mxu0 %v1165
        %1234 = vmatmul.bf16.gmra.mxu0 %v1043
        %v1235 = vpop.f32.mrf.mxu0
        %v1236 = vadd.f32 %v1079, %v1235
        %v1237 = vpop.f32.mrf.mxu0
        %v1238 = vadd.f32 %v1079, %v1237
        %1239 = vdwg.mxu0
        %1240 = vmatpush.bf16.msra.mxu0 %v1187
        %1241 = vmatpush.bf16.msra.mxu0 %v1184
        %1242 = vmatpush.bf16.msra.mxu0 %v1181
        %1243 = vmatpush.bf16.msra.mxu0 %v1178
        %1244 = vmatpush.bf16.msra.mxu0 %v1175
        %1245 = vmatpush.bf16.msra.mxu0 %v1172
        %1246 = vmatpush.bf16.msra.mxu0 %v1169
        %1247 = vmatpush.bf16.msra.mxu0 %v1166
        %1248 = vmatmul.bf16.gmra.mxu0 %v1043
        %v1249 = vpop.f32.mrf.mxu0
        %v1250 = vadd.f32 %v1080, %v1249
        %v1251 = vpop.f32.mrf.mxu0
        %v1252 = vadd.f32 %v1080, %v1251
        %1253 = vdwg.mxu0
        %v1254 = vmul.f32 %v1222, 0.17677669
        %v1255 = vmul.f32 %v1224, 0.17677669
        %v1256 = vpack.c.bf16 %v1254, %v1254
        %v1257 = vpack.c.bf16 %v1255, %v1255
        %v1258 = vpack.c.bf16 %v1236, %v1236
        %v1259 = vpack.c.bf16 %v1238, %v1238
        %v1260 = vpack.c.bf16 %v1250, %v1250
        %v1261 = vpack.c.bf16 %v1252, %v1252
        %v1263 = vperm.slane %v1042, 0
        %v1267 = vunpack.c.l.b16 %v1256
        %v1268 = vunpack.c.l.b16 %v1257
        %v1269 = vpack.c.b16 %v1268, %v1267
        %v1272 = vunpack.c.l.b16 %v1258
        %v1273 = vunpack.c.l.b16 %v1259
        %v1274 = vpack.c.b16 %v1273, %v1272
        %vm1275 = vcmask 261120
        %v1277 = vsel %vm1275, %v1269, 0
        %v1280 = vsel %vm1275, %v1274, 0
        %1282 = vmatpush.bf16.xpose.msra.mxu0 0
        %1283 = vmatpush.bf16.xpose.msra.mxu0 0
        %1284 = vmatpush.bf16.xpose.msra.mxu0 0
        %1285 = vmatpush.bf16.xpose.msra.mxu0 0
        %1286 = vmatpush.bf16.xpose.msra.mxu0 0
        %1287 = vmatpush.bf16.xpose.msra.mxu0 0
        %1288 = vmatpush.bf16.xpose.msra.mxu0 0
        %1289 = vmatpush.bf16.xpose.msra.mxu0 %v1280
        %1290 = vmatmul.bf16.gmra.mxu0 %v1277
        %v1291 = vpop.f32.mrf.mxu0
        %v1292 = vadd.f32 %v1263, %v1291
        %v1293 = vpop.f32.mrf.mxu0
        %v1294 = vadd.f32 %v1263, %v1293
        %1295 = vdwg.mxu0
        %vm1296 = vcmask 130048
        %v1297 = vsel %vm1296, %v1292, -inf
        %1298 = vmax.xlane.f32.xlu0 %v1297
        %v1299 = vpop.xlane.xlu0 %1298
        %v1300 = vsel %vm1296, %v1294, -inf
        %1301 = vmax.xlane.f32.xlu0 %v1300
        %v1302 = vpop.xlane.xlu0 %1301
        %v1303 = vsub.f32 %v1292, %v1299
        %v1304 = vsub.f32 %v1294, %v1302
        %v1305 = vmul.f32 %v1303, 1.442695
        %v1306 = vpow.pop %v1305
        %v1307 = vmul.f32 %v1304, 1.442695
        %v1308 = vpow.pop %v1307
        %v1309 = vsel %vm1296, %v1306, 0.0
        %1310 = vadd.xlane.f32.xlu0 %v1309
        %v1311 = vpop.xlane.xlu0 %1310
        %v1312 = vsel %vm1296, %v1308, 0.0
        %1313 = vadd.xlane.f32.xlu0 %v1312
        %v1314 = vpop.xlane.xlu0 %1313
        %v1315 = vrcp.pop %v1311
        %v1316 = vrcp.pop %v1314
        %v1317 = vmul.f32 %v1306, %v1315
        %v1318 = vmul.f32 %v1308, %v1316
        %v1319 = vpack.c.bf16 %v1318, %v1317
        %v1322 = vunpack.c.l.b16 %v1260
        %v1323 = vunpack.c.l.b16 %v1261
        %v1324 = vpack.c.b16 %v1323, %v1322
        %v1327 = vsel %vm1296, %v1319, 0
        %1329 = vmatpush.bf16.msra.mxu0 0
        %1330 = vmatpush.bf16.msra.mxu0 0
        %1331 = vmatpush.bf16.msra.mxu0 0
        %1332 = vmatpush.bf16.msra.mxu0 0
        %1333 = vmatpush.bf16.msra.mxu0 0
        %1334 = vmatpush.bf16.msra.mxu0 0
        %1335 = vmatpush.bf16.msra.mxu0 0
        %1336 = vmatpush.bf16.msra.mxu0 %v1324
        %1337 = vmatmul.bf16.gmra.mxu0 %v1327
        %v1338 = vpop.f32.mrf.mxu0
        %v1339 = vadd.f32 0.0, %v1338
        %v1340 = vpop.f32.mrf.mxu0
        %v1341 = vadd.f32 0.0, %v1340
        %1342 = vdwg.mxu0
        %1343 = vst.msk [vmem:[#allocation3] sm:$0xff] %vm1275, %v1339
        %1344 = vst.msk [vmem:[#allocation3 + $0x8] sm:$0xff] %vm1275, %v1341
        %1345 = vrot.lane.b32.xlu0 %v1269, 96
        %v1346 = vpop.permute.xlu0 %1345
        %1347 = vrot.lane.b32.xlu0 %v1274, 96
        %v1348 = vpop.permute.xlu0 %1347
        %v1350 = vsel %vm1275, %v1346, 0
        %v1353 = vsel %vm1275, %v1348, 0
        %1355 = vmatpush.bf16.xpose.msra.mxu0 0
        %1356 = vmatpush.bf16.xpose.msra.mxu0 0
        %1357 = vmatpush.bf16.xpose.msra.mxu0 0
        %1358 = vmatpush.bf16.xpose.msra.mxu0 0
        %1359 = vmatpush.bf16.xpose.msra.mxu0 0
        %1360 = vmatpush.bf16.xpose.msra.mxu0 0
        %1361 = vmatpush.bf16.xpose.msra.mxu0 0
        %1362 = vmatpush.bf16.xpose.msra.mxu0 %v1353
        %1363 = vmatmul.bf16.gmra.mxu0 %v1350
        %v1364 = vpop.f32.mrf.mxu0
        %v1365 = vadd.f32 %v1263, %v1364
        %v1366 = vpop.f32.mrf.mxu0
        %v1367 = vadd.f32 %v1263, %v1366
        %1368 = vdwg.mxu0
        %v1369 = vsel %vm1296, %v1365, -inf
        %1370 = vmax.xlane.f32.xlu0 %v1369
        %v1371 = vpop.xlane.xlu0 %1370
        %v1372 = vsel %vm1296, %v1367, -inf
        %1373 = vmax.xlane.f32.xlu0 %v1372
        %v1374 = vpop.xlane.xlu0 %1373
        %v1375 = vsub.f32 %v1365, %v1371
        %v1376 = vsub.f32 %v1367, %v1374
        %v1377 = vmul.f32 %v1375, 1.442695
        %v1378 = vpow.pop %v1377
        %v1379 = vmul.f32 %v1376, 1.442695
        %v1380 = vpow.pop %v1379
        %v1381 = vsel %vm1296, %v1378, 0.0
        %1382 = vadd.xlane.f32.xlu0 %v1381
        %v1383 = vpop.xlane.xlu0 %1382
        %v1384 = vsel %vm1296, %v1380, 0.0
        %1385 = vadd.xlane.f32.xlu0 %v1384
        %v1386 = vpop.xlane.xlu0 %1385
        %v1387 = vrcp.pop %v1383
        %v1388 = vrcp.pop %v1386
        %v1389 = vmul.f32 %v1378, %v1387
        %v1390 = vmul.f32 %v1380, %v1388
        %v1391 = vpack.c.bf16 %v1390, %v1389
        %1392 = vrot.lane.b32.xlu0 %v1324, 96
        %v1393 = vpop.permute.xlu0 %1392
        %v1396 = vsel %vm1296, %v1391, 0
        %1398 = vmatpush.bf16.msra.mxu0 0
        %1399 = vmatpush.bf16.msra.mxu0 0
        %1400 = vmatpush.bf16.msra.mxu0 0
        %1401 = vmatpush.bf16.msra.mxu0 0
        %1402 = vmatpush.bf16.msra.mxu0 0
        %1403 = vmatpush.bf16.msra.mxu0 0
        %1404 = vmatpush.bf16.msra.mxu0 0
        %1405 = vmatpush.bf16.msra.mxu0 %v1393
        %1406 = vmatmul.bf16.gmra.mxu0 %v1396
        %v1407 = vpop.f32.mrf.mxu0
        %v1408 = vadd.f32 0.0, %v1407
        %v1409 = vpop.f32.mrf.mxu0
        %v1410 = vadd.f32 0.0, %v1409
        %1411 = vdwg.mxu0
        %1414 = vrot.lane.b32.xlu0 %v1408, 32
        %v1415 = vpop.permute.xlu0 %1414
        %1416 = vrot.lane.b32.xlu0 %v1410, 32
        %v1417 = vpop.permute.xlu0 %1416
        %vm1420 = vcmask 523520
        %1421 = vst.msk [vmem:[#allocation3] sm:$0xff] %vm1420, %v1415
        %1422 = vst.msk [vmem:[#allocation3 + $0x8] sm:$0xff] %vm1420, %v1417
        %1423 = vrot.lane.b32.xlu0 %v1269, 64
        %v1424 = vpop.permute.xlu0 %1423
        %1425 = vrot.lane.b32.xlu0 %v1274, 64
        %v1426 = vpop.permute.xlu0 %1425
        %v1428 = vsel %vm1275, %v1424, 0
        %v1431 = vsel %vm1275, %v1426, 0
        %1433 = vmatpush.bf16.xpose.msra.mxu0 0
        %1434 = vmatpush.bf16.xpose.msra.mxu0 0
        %1435 = vmatpush.bf16.xpose.msra.mxu0 0
        %1436 = vmatpush.bf16.xpose.msra.mxu0 0
        %1437 = vmatpush.bf16.xpose.msra.mxu0 0
        %1438 = vmatpush.bf16.xpose.msra.mxu0 0
        %1439 = vmatpush.bf16.xpose.msra.mxu0 0
        %1440 = vmatpush.bf16.xpose.msra.mxu0 %v1431
        %1441 = vmatmul.bf16.gmra.mxu0 %v1428
        %v1442 = vpop.f32.mrf.mxu0
        %v1443 = vadd.f32 %v1263, %v1442
        %v1444 = vpop.f32.mrf.mxu0
        %v1445 = vadd.f32 %v1263, %v1444
        %1446 = vdwg.mxu0
        %v1447 = vsel %vm1296, %v1443, -inf
        %1448 = vmax.xlane.f32.xlu0 %v1447
        %v1449 = vpop.xlane.xlu0 %1448
        %v1450 = vsel %vm1296, %v1445, -inf
        %1451 = vmax.xlane.f32.xlu0 %v1450
        %v1452 = vpop.xlane.xlu0 %1451
        %v1453 = vsub.f32 %v1443, %v1449
        %v1454 = vsub.f32 %v1445, %v1452
        %v1455 = vmul.f32 %v1453, 1.442695
        %v1456 = vpow.pop %v1455
        %v1457 = vmul.f32 %v1454, 1.442695
        %v1458 = vpow.pop %v1457
        %v1459 = vsel %vm1296, %v1456, 0.0
        %1460 = vadd.xlane.f32.xlu0 %v1459
        %v1461 = vpop.xlane.xlu0 %1460
        %v1462 = vsel %vm1296, %v1458, 0.0
        %1463 = vadd.xlane.f32.xlu0 %v1462
        %v1464 = vpop.xlane.xlu0 %1463
        %v1465 = vrcp.pop %v1461
        %v1466 = vrcp.pop %v1464
        %v1467 = vmul.f32 %v1456, %v1465
        %v1468 = vmul.f32 %v1458, %v1466
        %v1469 = vpack.c.bf16 %v1468, %v1467
        %1470 = vrot.lane.b32.xlu0 %v1324, 64
        %v1471 = vpop.permute.xlu0 %1470
        %v1474 = vsel %vm1296, %v1469, 0
        %1476 = vmatpush.bf16.msra.mxu0 0
        %1477 = vmatpush.bf16.msra.mxu0 0
        %1478 = vmatpush.bf16.msra.mxu0 0
        %1479 = vmatpush.bf16.msra.mxu0 0
        %1480 = vmatpush.bf16.msra.mxu0 0
        %1481 = vmatpush.bf16.msra.mxu0 0
        %1482 = vmatpush.bf16.msra.mxu0 0
        %1483 = vmatpush.bf16.msra.mxu0 %v1471
        %1484 = vmatmul.bf16.gmra.mxu0 %v1474
        %v1485 = vpop.f32.mrf.mxu0
        %v1486 = vadd.f32 0.0, %v1485
        %v1487 = vpop.f32.mrf.mxu0
        %v1488 = vadd.f32 0.0, %v1487
        %1489 = vdwg.mxu0
        %1492 = vrot.lane.b32.xlu0 %v1486, 64
        %v1493 = vpop.permute.xlu0 %1492
        %1494 = vrot.lane.b32.xlu0 %v1488, 64
        %v1495 = vpop.permute.xlu0 %1494
        %vm1498 = vcmask 785920
        %1499 = vst.msk [vmem:[#allocation3] sm:$0xff] %vm1498, %v1493
        %1500 = vst.msk [vmem:[#allocation3 + $0x8] sm:$0xff] %vm1498, %v1495
        %1501 = vrot.lane.b32.xlu0 %v1269, 32
        %v1502 = vpop.permute.xlu0 %1501
        %1503 = vrot.lane.b32.xlu0 %v1274, 32
        %v1504 = vpop.permute.xlu0 %1503
        %v1506 = vsel %vm1275, %v1502, 0
        %v1509 = vsel %vm1275, %v1504, 0
        %1511 = vmatpush.bf16.xpose.msra.mxu0 0
        %1512 = vmatpush.bf16.xpose.msra.mxu0 0
        %1513 = vmatpush.bf16.xpose.msra.mxu0 0
        %1514 = vmatpush.bf16.xpose.msra.mxu0 0
        %1515 = vmatpush.bf16.xpose.msra.mxu0 0
        %1516 = vmatpush.bf16.xpose.msra.mxu0 0
        %1517 = vmatpush.bf16.xpose.msra.mxu0 0
        %1518 = vmatpush.bf16.xpose.msra.mxu0 %v1509
        %1519 = vmatmul.bf16.gmra.mxu0 %v1506
        %v1520 = vpop.f32.mrf.mxu0
        %v1521 = vadd.f32 %v1263, %v1520
        %v1522 = vpop.f32.mrf.mxu0
        %v1523 = vadd.f32 %v1263, %v1522
        %1524 = vdwg.mxu0
        %v1525 = vsel %vm1296, %v1521, -inf
        %1526 = vmax.xlane.f32.xlu0 %v1525
        %v1527 = vpop.xlane.xlu0 %1526
        %v1528 = vsel %vm1296, %v1523, -inf
        %1529 = vmax.xlane.f32.xlu0 %v1528
        %v1530 = vpop.xlane.xlu0 %1529
        %v1531 = vsub.f32 %v1521, %v1527
        %v1532 = vsub.f32 %v1523, %v1530
        %v1533 = vmul.f32 %v1531, 1.442695
        %v1534 = vpow.pop %v1533
        %v1535 = vmul.f32 %v1532, 1.442695
        %v1536 = vpow.pop %v1535
        %v1537 = vsel %vm1296, %v1534, 0.0
        %1538 = vadd.xlane.f32.xlu0 %v1537
        %v1539 = vpop.xlane.xlu0 %1538
        %v1540 = vsel %vm1296, %v1536, 0.0
        %1541 = vadd.xlane.f32.xlu0 %v1540
        %v1542 = vpop.xlane.xlu0 %1541
        %v1543 = vrcp.pop %v1539
        %v1544 = vrcp.pop %v1542
        %v1545 = vmul.f32 %v1534, %v1543
        %v1546 = vmul.f32 %v1536, %v1544
        %v1547 = vpack.c.bf16 %v1546, %v1545
        %1548 = vrot.lane.b32.xlu0 %v1324, 32
        %v1549 = vpop.permute.xlu0 %1548
        %v1552 = vsel %vm1296, %v1547, 0
        %1554 = vmatpush.bf16.msra.mxu0 0
        %1555 = vmatpush.bf16.msra.mxu0 0
        %1556 = vmatpush.bf16.msra.mxu0 0
        %1557 = vmatpush.bf16.msra.mxu0 0
        %1558 = vmatpush.bf16.msra.mxu0 0
        %1559 = vmatpush.bf16.msra.mxu0 0
        %1560 = vmatpush.bf16.msra.mxu0 0
        %1561 = vmatpush.bf16.msra.mxu0 %v1549
        %1562 = vmatmul.bf16.gmra.mxu0 %v1552
        %v1563 = vpop.f32.mrf.mxu0
        %v1564 = vadd.f32 0.0, %v1563
        %v1565 = vpop.f32.mrf.mxu0
        %v1566 = vadd.f32 0.0, %v1565
        %1567 = vdwg.mxu0
        %1570 = vrot.lane.b32.xlu0 %v1564, 96
        %v1571 = vpop.permute.xlu0 %1570
        %1572 = vrot.lane.b32.xlu0 %v1566, 96
        %v1573 = vpop.permute.xlu0 %1572
        %vm1576 = vcmask 1048320
        %1577 = vst.msk [vmem:[#allocation3] sm:$0xff] %vm1576, %v1571
        %1578 = vst.msk [vmem:[#allocation3 + $0x8] sm:$0xff] %vm1576, %v1573
        %v1579 = vld [vmem:[#allocation3] sm:$0xff]
        %v1580 = vld [vmem:[#allocation3 + $0x8] sm:$0xff]
        %v1581 = vpack.c.bf16 %v1580, %v1579
        %v1582 = vld [vmem:[%s943] sm:$0xf]
        %v1583 = vld [vmem:[%s943 + $0x4] sm:$0xf]
        %v1584 = vld [vmem:[%s943 + $0x8] sm:$0xf]
        %v1585 = vld [vmem:[%s943 + $0xc] sm:$0xf]
        %v1586 = vld [vmem:[%s943 + $0x10] sm:$0xf]
        %v1587 = vld [vmem:[%s943 + $0x14] sm:$0xf]
        %v1588 = vld [vmem:[%s943 + $0x18] sm:$0xf]
        %v1589 = vld [vmem:[%s943 + $0x1c] sm:$0xf]
        %v1590 = vld [vmem:[%s943 + $0x20] sm:$0xf]
        %v1591 = vld [vmem:[%s943 + $0x24] sm:$0xf]
        %v1592 = vld [vmem:[%s943 + $0x28] sm:$0xf]
        %v1593 = vld [vmem:[%s943 + $0x2c] sm:$0xf]
        %v1594 = vld [vmem:[%s943 + $0x30] sm:$0xf]
        %v1595 = vld [vmem:[%s943 + $0x34] sm:$0xf]
        %v1596 = vld [vmem:[%s943 + $0x38] sm:$0xf]
        %v1597 = vld [vmem:[%s943 + $0x3c] sm:$0xf]
        %v1598 = vld [vmem:[%s946] sm:$0x1]
        %v1600 = vperm.slane %v1598, 0
        %v1618 = vunpack.c.l.b16 %v1582
        %v1619 = vunpack.c.l.b16 %v1583
        %v1620 = vunpack.c.l.b16 %v1584
        %v1621 = vunpack.c.l.b16 %v1585
        %v1622 = vunpack.c.l.b16 %v1586
        %v1623 = vunpack.c.l.b16 %v1587
        %v1624 = vunpack.c.l.b16 %v1588
        %v1625 = vunpack.c.l.b16 %v1589
        %v1626 = vunpack.c.l.b16 %v1590
        %v1627 = vunpack.c.l.b16 %v1591
        %v1628 = vunpack.c.l.b16 %v1592
        %v1629 = vunpack.c.l.b16 %v1593
        %v1630 = vunpack.c.l.b16 %v1594
        %v1631 = vunpack.c.l.b16 %v1595
        %v1632 = vunpack.c.l.b16 %v1596
        %v1633 = vunpack.c.l.b16 %v1597
        %v1634 = vpack.c.b16 %v1619, %v1618
        %v1635 = vpack.c.b16 %v1621, %v1620
        %v1636 = vpack.c.b16 %v1623, %v1622
        %v1637 = vpack.c.b16 %v1625, %v1624
        %v1638 = vpack.c.b16 %v1627, %v1626
        %v1639 = vpack.c.b16 %v1629, %v1628
        %v1640 = vpack.c.b16 %v1631, %v1630
        %v1641 = vpack.c.b16 %v1633, %v1632
        %1650 = vmatpush.bf16.msra.mxu0 %v1641
        %1651 = vmatpush.bf16.msra.mxu0 %v1640
        %1652 = vmatpush.bf16.msra.mxu0 %v1639
        %1653 = vmatpush.bf16.msra.mxu0 %v1638
        %1654 = vmatpush.bf16.msra.mxu0 %v1637
        %1655 = vmatpush.bf16.msra.mxu0 %v1636
        %1656 = vmatpush.bf16.msra.mxu0 %v1635
        %1657 = vmatpush.bf16.msra.mxu0 %v1634
        %1658 = vmatmul.bf16.gmra.mxu0 %v1581
        %v1659 = vpop.f32.mrf.mxu0
        %v1660 = vadd.f32 %v1600, %v1659
        %v1661 = vpop.f32.mrf.mxu0
        %v1662 = vadd.f32 %v1600, %v1661
        %1663 = vdwg.mxu0
        %v1664 = vadd.f32 %v1040, %v1660
        %v1665 = vadd.f32 %v1041, %v1662
        %v1666 = vld [vmem:[%s949] sm:$0x1]
        %v1667 = vld [vmem:[%s952] sm:$0x1]
        %1668 = vadd.xlane.f32.xlu0 %v1664
        %v1669 = vpop.xlane.xlu0 %1668
        %1670 = vadd.xlane.f32.xlu0 %v1665
        %v1671 = vpop.xlane.xlu0 %1670
        %v1672 = vrcp.pop 128.0
        %v1673 = vmul.f32 128.0, %v1672
        %v1674 = vsub.f32 1.0, %v1673
        %v1675 = vmul.f32 %v1672, %v1674
        %v1676 = vadd.f32 %v1672, %v1675
        %vm1677 = vweird.f32 %v1672
        %v1678 = vsel %vm1677, %v1672, %v1676
        %v1679 = vmul.f32 %v1669, %v1678
        %v1680 = vmul.f32 %v1671, %v1678
        %v1681 = vsub.f32 %v1664, %v1679
        %v1682 = vsub.f32 %v1665, %v1680
        %v1683 = vmul.f32 %v1681, %v1681
        %v1684 = vmul.f32 %v1682, %v1682
        %1685 = vadd.xlane.f32.xlu0 %v1683
        %v1686 = vpop.xlane.xlu0 %1685
        %1687 = vadd.xlane.f32.xlu0 %v1684
        %v1688 = vpop.xlane.xlu0 %1687
        %v1689 = vmul.f32 %v1686, %v1678
        %v1690 = vmul.f32 %v1688, %v1678
        %v1691 = vadd.f32 %v1689, 1e-12
        %v1692 = vadd.f32 %v1690, 1e-12
        %v1693 = vrsqrt.pop %v1691
        %v1694 = vmul.f32 %v1693, %v1691
        %v1695 = vmul.f32 %v1694, %v1693
        %v1696 = vmul.f32 0.5, %v1695
        %v1697 = vsub.f32 1.5, %v1696
        %v1698 = vmul.f32 %v1693, %v1697
        %vm1699 = vweird.f32 %v1691
        %vm1700 = vweird.f32 %v1693
        %vm1701 = vmor %vm1699, %vm1700
        %v1702 = vsel %vm1701, %v1693, %v1698
        %v1703 = vrsqrt.pop %v1692
        %v1704 = vmul.f32 %v1703, %v1692
        %v1705 = vmul.f32 %v1704, %v1703
        %v1706 = vmul.f32 0.5, %v1705
        %v1707 = vsub.f32 1.5, %v1706
        %v1708 = vmul.f32 %v1703, %v1707
        %vm1709 = vweird.f32 %v1692
        %vm1710 = vweird.f32 %v1703
        %vm1711 = vmor %vm1709, %vm1710
        %v1712 = vsel %vm1711, %v1703, %v1708
        %v1713 = vmul.f32 %v1681, %v1702
        %v1714 = vmul.f32 %v1682, %v1712
        %v1716 = vperm.slane %v1666, 0
        %v1718 = vmul.f32 %v1713, %v1716
        %v1719 = vmul.f32 %v1714, %v1716
        %v1721 = vperm.slane %v1667, 0
        %v1723 = vadd.f32 %v1718, %v1721
        %v1724 = vadd.f32 %v1719, %v1721
        %v1725 = vpack.c.bf16 %v1724, %v1723
        %v1726 = vld [vmem:[%s796] sm:$0xff]
        %v1727 = vld [vmem:[%s796 + $0x8] sm:$0xff]
        %v1728 = vld [vmem:[%s796 + $0x10] sm:$0xff]
        %v1729 = vld [vmem:[%s796 + $0x18] sm:$0xff]
        %v1730 = vld [vmem:[%s796 + $0x20] sm:$0xff]
        %v1731 = vld [vmem:[%s796 + $0x28] sm:$0xff]
        %v1732 = vld [vmem:[%s796 + $0x30] sm:$0xff]
        %v1733 = vld [vmem:[%s796 + $0x38] sm:$0xff]
        %v1734 = vld [vmem:[%s796 + $0x40] sm:$0xff]
        %v1735 = vld [vmem:[%s796 + $0x48] sm:$0xff]
        %v1736 = vld [vmem:[%s796 + $0x50] sm:$0xff]
        %v1737 = vld [vmem:[%s796 + $0x58] sm:$0xff]
        %v1738 = vld [vmem:[%s796 + $0x60] sm:$0xff]
        %v1739 = vld [vmem:[%s796 + $0x68] sm:$0xff]
        %v1740 = vld [vmem:[%s796 + $0x70] sm:$0xff]
        %v1741 = vld [vmem:[%s796 + $0x78] sm:$0xff]
        %v1742 = vld [vmem:[%s956] sm:$0x3]
        %v1744 = vperm.slane %v1742, 0
        %v1745 = vperm.slane %v1742, 1
        %v1764 = vunpack.c.l.b16 %v1726
        %v1765 = vunpack.c.h.b16 %v1726
        %v1766 = vunpack.c.l.b16 %v1727
        %v1767 = vunpack.c.h.b16 %v1727
        %v1768 = vunpack.c.l.b16 %v1728
        %v1769 = vunpack.c.h.b16 %v1728
        %v1770 = vunpack.c.l.b16 %v1729
        %v1771 = vunpack.c.h.b16 %v1729
        %v1772 = vunpack.c.l.b16 %v1730
        %v1773 = vunpack.c.h.b16 %v1730
        %v1774 = vunpack.c.l.b16 %v1731
        %v1775 = vunpack.c.h.b16 %v1731
        %v1776 = vunpack.c.l.b16 %v1732
        %v1777 = vunpack.c.h.b16 %v1732
        %v1778 = vunpack.c.l.b16 %v1733
        %v1779 = vunpack.c.h.b16 %v1733
        %v1780 = vunpack.c.l.b16 %v1734
        %v1781 = vunpack.c.h.b16 %v1734
        %v1782 = vunpack.c.l.b16 %v1735
        %v1783 = vunpack.c.h.b16 %v1735
        %v1784 = vunpack.c.l.b16 %v1736
        %v1785 = vunpack.c.h.b16 %v1736
        %v1786 = vunpack.c.l.b16 %v1737
        %v1787 = vunpack.c.h.b16 %v1737
        %v1788 = vunpack.c.l.b16 %v1738
        %v1789 = vunpack.c.h.b16 %v1738
        %v1790 = vunpack.c.l.b16 %v1739
        %v1791 = vunpack.c.h.b16 %v1739
        %v1792 = vunpack.c.l.b16 %v1740
        %v1793 = vunpack.c.h.b16 %v1740
        %v1794 = vunpack.c.l.b16 %v1741
        %v1795 = vunpack.c.h.b16 %v1741
        %v1796 = vpack.c.b16 %v1766, %v1764
        %v1797 = vpack.c.b16 %v1767, %v1765
        %v1798 = vpack.c.b16 %v1770, %v1768
        %v1799 = vpack.c.b16 %v1771, %v1769
        %v1800 = vpack.c.b16 %v1774, %v1772
        %v1801 = vpack.c.b16 %v1775, %v1773
        %v1802 = vpack.c.b16 %v1778, %v1776
        %v1803 = vpack.c.b16 %v1779, %v1777
        %v1804 = vpack.c.b16 %v1782, %v1780
        %v1805 = vpack.c.b16 %v1783, %v1781
        %v1806 = vpack.c.b16 %v1786, %v1784
        %v1807 = vpack.c.b16 %v1787, %v1785
        %v1808 = vpack.c.b16 %v1790, %v1788
        %v1809 = vpack.c.b16 %v1791, %v1789
        %v1810 = vpack.c.b16 %v1794, %v1792
        %v1811 = vpack.c.b16 %v1795, %v1793
        %1828 = vmatpush.bf16.msra.mxu0 %v1810
        %1829 = vmatpush.bf16.msra.mxu0 %v1808
        %1830 = vmatpush.bf16.msra.mxu0 %v1806
        %1831 = vmatpush.bf16.msra.mxu0 %v1804
        %1832 = vmatpush.bf16.msra.mxu0 %v1802
        %1833 = vmatpush.bf16.msra.mxu0 %v1800
        %1834 = vmatpush.bf16.msra.mxu0 %v1798
        %1835 = vmatpush.bf16.msra.mxu0 %v1796
        %1836 = vmatmul.bf16.gmra.mxu0 %v1725
        %v1837 = vpop.f32.mrf.mxu0
        %v1838 = vadd.f32 %v1744, %v1837
        %v1839 = vpop.f32.mrf.mxu0
        %v1840 = vadd.f32 %v1744, %v1839
        %1841 = vdwg.mxu0
        %1842 = vmatpush.bf16.msra.mxu0 %v1811
        %1843 = vmatpush.bf16.msra.mxu0 %v1809
        %1844 = vmatpush.bf16.msra.mxu0 %v1807
        %1845 = vmatpush.bf16.msra.mxu0 %v1805
        %1846 = vmatpush.bf16.msra.mxu0 %v1803
        %1847 = vmatpush.bf16.msra.mxu0 %v1801
        %1848 = vmatpush.bf16.msra.mxu0 %v1799
        %1849 = vmatpush.bf16.msra.mxu0 %v1797
        %1850 = vmatmul.bf16.gmra.mxu0 %v1725
        %v1851 = vpop.f32.mrf.mxu0
        %v1852 = vadd.f32 %v1745, %v1851
        %v1853 = vpop.f32.mrf.mxu0
        %v1854 = vadd.f32 %v1745, %v1853
        %1855 = vdwg.mxu0
        %v1856 = vmul.f32 %v1838, %v1838
        %v1857 = vmul.f32 %v1852, %v1852
        %v1858 = vmul.f32 %v1840, %v1840
        %v1859 = vmul.f32 %v1854, %v1854
        %v1860 = vmul.f32 %v1838, %v1856
        %v1861 = vmul.f32 %v1852, %v1857
        %v1862 = vmul.f32 %v1840, %v1858
        %v1863 = vmul.f32 %v1854, %v1859
        %v1864 = vmul.f32 %v1860, 0.044715
        %v1865 = vmul.f32 %v1861, 0.044715
        %v1866 = vmul.f32 %v1862, 0.044715
        %v1867 = vmul.f32 %v1863, 0.044715
        %v1868 = vadd.f32 %v1838, %v1864
        %v1869 = vadd.f32 %v1852, %v1865
        %v1870 = vadd.f32 %v1840, %v1866
        %v1871 = vadd.f32 %v1854, %v1867
        %v1872 = vmul.f32 %v1868, 0.7978846
        %v1873 = vmul.f32 %v1869, 0.7978846
        %v1874 = vmul.f32 %v1870, 0.7978846
        %v1875 = vmul.f32 %v1871, 0.7978846
        %v1876 = vtanh.pop %v1872
        %v1877 = vtanh.pop %v1873
        %v1878 = vtanh.pop %v1874
        %v1879 = vtanh.pop %v1875
        %v1880 = vadd.f32 %v1876, 1.0
        %v1881 = vadd.f32 %v1877, 1.0
        %v1882 = vadd.f32 %v1878, 1.0
        %v1883 = vadd.f32 %v1879, 1.0
        %v1884 = vmul.f32 %v1880, 0.5
        %v1885 = vmul.f32 %v1881, 0.5
        %v1886 = vmul.f32 %v1882, 0.5
        %v1887 = vmul.f32 %v1883, 0.5
        %v1888 = vmul.f32 %v1838, %v1884
        %v1889 = vmul.f32 %v1852, %v1885
        %v1890 = vmul.f32 %v1840, %v1886
        %v1891 = vmul.f32 %v1854, %v1887
        %v1892 = vpack.c.bf16 %v1890, %v1888
        %v1893 = vpack.c.bf16 %v1891, %v1889
        %v1894 = vld [vmem:[%s806] sm:$0xf]
        %v1895 = vld [vmem:[%s806 + $0x4] sm:$0xf]
        %v1896 = vld [vmem:[%s806 + $0x8] sm:$0xf]
        %v1897 = vld [vmem:[%s806 + $0xc] sm:$0xf]
        %v1898 = vld [vmem:[%s806 + $0x10] sm:$0xf]
        %v1899 = vld [vmem:[%s806 + $0x14] sm:$0xf]
        %v1900 = vld [vmem:[%s806 + $0x18] sm:$0xf]
        %v1901 = vld [vmem:[%s806 + $0x1c] sm:$0xf]
        %v1902 = vld [vmem:[%s806 + $0x20] sm:$0xf]
        %v1903 = vld [vmem:[%s806 + $0x24] sm:$0xf]
        %v1904 = vld [vmem:[%s806 + $0x28] sm:$0xf]
        %v1905 = vld [vmem:[%s806 + $0x2c] sm:$0xf]
        %v1906 = vld [vmem:[%s806 + $0x30] sm:$0xf]
        %v1907 = vld [vmem:[%s806 + $0x34] sm:$0xf]
        %v1908 = vld [vmem:[%s806 + $0x38] sm:$0xf]
        %v1909 = vld [vmem:[%s806 + $0x3c] sm:$0xf]
        %v1910 = vld [vmem:[%s806 + $0x40] sm:$0xf]
        %v1911 = vld [vmem:[%s806 + $0x44] sm:$0xf]
        %v1912 = vld [vmem:[%s806 + $0x48] sm:$0xf]
        %v1913 = vld [vmem:[%s806 + $0x4c] sm:$0xf]
        %v1914 = vld [vmem:[%s806 + $0x50] sm:$0xf]
        %v1915 = vld [vmem:[%s806 + $0x54] sm:$0xf]
        %v1916 = vld [vmem:[%s806 + $0x58] sm:$0xf]
        %v1917 = vld [vmem:[%s806 + $0x5c] sm:$0xf]
        %v1918 = vld [vmem:[%s806 + $0x60] sm:$0xf]
        %v1919 = vld [vmem:[%s806 + $0x64] sm:$0xf]
        %v1920 = vld [vmem:[%s806 + $0x68] sm:$0xf]
        %v1921 = vld [vmem:[%s806 + $0x6c] sm:$0xf]
        %v1922 = vld [vmem:[%s806 + $0x70] sm:$0xf]
        %v1923 = vld [vmem:[%s806 + $0x74] sm:$0xf]
        %v1924 = vld [vmem:[%s806 + $0x78] sm:$0xf]
        %v1925 = vld [vmem:[%s806 + $0x7c] sm:$0xf]
        %v1926 = vld [vmem:[%s959] sm:$0x1]
        %v1928 = vperm.slane %v1926, 0
        %v1962 = vunpack.c.l.b16 %v1894
        %v1963 = vunpack.c.l.b16 %v1895
        %v1964 = vunpack.c.l.b16 %v1896
        %v1965 = vunpack.c.l.b16 %v1897
        %v1966 = vunpack.c.l.b16 %v1898
        %v1967 = vunpack.c.l.b16 %v1899
        %v1968 = vunpack.c.l.b16 %v1900
        %v1969 = vunpack.c.l.b16 %v1901
        %v1970 = vunpack.c.l.b16 %v1902
        %v1971 = vunpack.c.l.b16 %v1903
        %v1972 = vunpack.c.l.b16 %v1904
        %v1973 = vunpack.c.l.b16 %v1905
        %v1974 = vunpack.c.l.b16 %v1906
        %v1975 = vunpack.c.l.b16 %v1907
        %v1976 = vunpack.c.l.b16 %v1908
        %v1977 = vunpack.c.l.b16 %v1909
        %v1978 = vunpack.c.l.b16 %v1910
        %v1979 = vunpack.c.l.b16 %v1911
        %v1980 = vunpack.c.l.b16 %v1912
        %v1981 = vunpack.c.l.b16 %v1913
        %v1982 = vunpack.c.l.b16 %v1914
        %v1983 = vunpack.c.l.b16 %v1915
        %v1984 = vunpack.c.l.b16 %v1916
        %v1985 = vunpack.c.l.b16 %v1917
        %v1986 = vunpack.c.l.b16 %v1918
        %v1987 = vunpack.c.l.b16 %v1919
        %v1988 = vunpack.c.l.b16 %v1920
        %v1989 = vunpack.c.l.b16 %v1921
        %v1990 = vunpack.c.l.b16 %v1922
        %v1991 = vunpack.c.l.b16 %v1923
        %v1992 = vunpack.c.l.b16 %v1924
        %v1993 = vunpack.c.l.b16 %v1925
        %v1994 = vpack.c.b16 %v1963, %v1962
        %v1995 = vpack.c.b16 %v1965, %v1964
        %v1996 = vpack.c.b16 %v1967, %v1966
        %v1997 = vpack.c.b16 %v1969, %v1968
        %v1998 = vpack.c.b16 %v1971, %v1970
        %v1999 = vpack.c.b16 %v1973, %v1972
        %v2000 = vpack.c.b16 %v1975, %v1974
        %v2001 = vpack.c.b16 %v1977, %v1976
        %v2002 = vpack.c.b16 %v1979, %v1978
        %v2003 = vpack.c.b16 %v1981, %v1980
        %v2004 = vpack.c.b16 %v1983, %v1982
        %v2005 = vpack.c.b16 %v1985, %v1984
        %v2006 = vpack.c.b16 %v1987, %v1986
        %v2007 = vpack.c.b16 %v1989, %v1988
        %v2008 = vpack.c.b16 %v1991, %v1990
        %v2009 = vpack.c.b16 %v1993, %v1992
        %2026 = vmatpush.bf16.msra.mxu0 %v2001
        %2027 = vmatpush.bf16.msra.mxu0 %v2000
        %2028 = vmatpush.bf16.msra.mxu0 %v1999
        %2029 = vmatpush.bf16.msra.mxu0 %v1998
        %2030 = vmatpush.bf16.msra.mxu0 %v1997
        %2031 = vmatpush.bf16.msra.mxu0 %v1996
        %2032 = vmatpush.bf16.msra.mxu0 %v1995
        %2033 = vmatpush.bf16.msra.mxu0 %v1994
        %2034 = vmatmul.bf16.gmra.mxu0 %v1892
        %v2035 = vpop.f32.mrf.mxu0
        %v2036 = vadd.f32 %v1928, %v2035
        %v2037 = vpop.f32.mrf.mxu0
        %v2038 = vadd.f32 %v1928, %v2037
        %2039 = vdwg.mxu0
        %2040 = vmatpush.bf16.msra.mxu0 %v2009
        %2041 = vmatpush.bf16.msra.mxu0 %v2008
        %2042 = vmatpush.bf16.msra.mxu0 %v2007
        %2043 = vmatpush.bf16.msra.mxu0 %v2006
        %2044 = vmatpush.bf16.msra.mxu0 %v2005
        %2045 = vmatpush.bf16.msra.mxu0 %v2004
        %2046 = vmatpush.bf16.msra.mxu0 %v2003
        %2047 = vmatpush.bf16.msra.mxu0 %v2002
        %2048 = vmatmul.bf16.gmra.mxu0 %v1893
        %v2049 = vpop.f32.mrf.mxu0
        %v2050 = vadd.f32 %v2036, %v2049
        %v2051 = vpop.f32.mrf.mxu0
        %v2052 = vadd.f32 %v2038, %v2051
        %2053 = vdwg.mxu0
        %v2054 = vadd.f32 %v1723, %v2050
        %v2055 = vadd.f32 %v1724, %v2052
        %v2056 = vld [vmem:[%s962] sm:$0x1]
        %v2057 = vld [vmem:[%s965] sm:$0x1]
        %2058 = vadd.xlane.f32.xlu0 %v2054
        %v2059 = vpop.xlane.xlu0 %2058
        %2060 = vadd.xlane.f32.xlu0 %v2055
        %v2061 = vpop.xlane.xlu0 %2060
        %v2062 = vmul.f32 %v2059, %v1678
        %v2063 = vmul.f32 %v2061, %v1678
        %v2064 = vsub.f32 %v2054, %v2062
        %v2065 = vsub.f32 %v2055, %v2063
        %v2066 = vmul.f32 %v2064, %v2064
        %v2067 = vmul.f32 %v2065, %v2065
        %2068 = vadd.xlane.f32.xlu0 %v2066
        %v2069 = vpop.xlane.xlu0 %2068
        %2070 = vadd.xlane.f32.xlu0 %v2067
        %v2071 = vpop.xlane.xlu0 %2070
        %v2072 = vmul.f32 %v2069, %v1678
        %v2073 = vmul.f32 %v2071, %v1678
        %v2074 = vadd.f32 %v2072, 1e-12
        %v2075 = vadd.f32 %v2073, 1e-12
        %v2076 = vrsqrt.pop %v2074
        %v2077 = vmul.f32 %v2076, %v2074
        %v2078 = vmul.f32 %v2077, %v2076
        %v2079 = vmul.f32 0.5, %v2078
        %v2080 = vsub.f32 1.5, %v2079
        %v2081 = vmul.f32 %v2076, %v2080
        %vm2082 = vweird.f32 %v2074
        %vm2083 = vweird.f32 %v2076
        %vm2084 = vmor %vm2082, %vm2083
        %v2085 = vsel %vm2084, %v2076, %v2081
        %v2086 = vrsqrt.pop %v2075
        %v2087 = vmul.f32 %v2086, %v2075
        %v2088 = vmul.f32 %v2087, %v2086
        %v2089 = vmul.f32 0.5, %v2088
        %v2090 = vsub.f32 1.5, %v2089
        %v2091 = vmul.f32 %v2086, %v2090
        %vm2092 = vweird.f32 %v2075
        %vm2093 = vweird.f32 %v2086
        %vm2094 = vmor %vm2092, %vm2093
        %v2095 = vsel %vm2094, %v2086, %v2091
        %v2096 = vmul.f32 %v2064, %v2085
        %v2097 = vmul.f32 %v2065, %v2095
        %v2099 = vperm.slane %v2056, 0
        %v2101 = vmul.f32 %v2096, %v2099
        %v2102 = vmul.f32 %v2097, %v2099
        %v2104 = vperm.slane %v2057, 0
        %v2106 = vadd.f32 %v2101, %v2104
        %v2107 = vadd.f32 %v2102, %v2104
        %2108 = vst [vmem:[#allocation2] sm:$0xff] %v2106
        %2109 = vst [vmem:[#allocation2 + $0x8] sm:$0xff] %v2107
        %p2110 = scmp.eq.s32.totalorder %s48, 1
        // Predicated region
        $region117: #{text_model_forward.1} parent=103 // pred_check
          %p2111 = pneg %p2110
        $region118: #{text_model_forward.1} parent=103 // pred_check_branch
          %2113 = sbr.rel (%p2111) target = $region120
        $region119: #{text_model_forward.1} parent=103 // pred_region
          %v2114 = vpack.c.bf16 %v2106, %v2106
          %v2115 = vld [vmem:[%s16] sm:$0xf]
          %v2116 = vld [vmem:[%s16 + $0x4] sm:$0xf]
          %v2117 = vld [vmem:[%s16 + $0x8] sm:$0xf]
          %v2118 = vld [vmem:[%s16 + $0xc] sm:$0xf]
          %v2119 = vld [vmem:[%s16 + $0x10] sm:$0xf]
          %v2120 = vld [vmem:[%s16 + $0x14] sm:$0xf]
          %v2121 = vld [vmem:[%s16 + $0x18] sm:$0xf]
          %v2122 = vld [vmem:[%s16 + $0x1c] sm:$0xf]
          %v2123 = vld [vmem:[%s16 + $0x20] sm:$0xf]
          %v2124 = vld [vmem:[%s16 + $0x24] sm:$0xf]
          %v2125 = vld [vmem:[%s16 + $0x28] sm:$0xf]
          %v2126 = vld [vmem:[%s16 + $0x2c] sm:$0xf]
          %v2127 = vld [vmem:[%s16 + $0x30] sm:$0xf]
          %v2128 = vld [vmem:[%s16 + $0x34] sm:$0xf]
          %v2129 = vld [vmem:[%s16 + $0x38] sm:$0xf]
          %v2130 = vld [vmem:[%s16 + $0x3c] sm:$0xf]
          %v2131 = vld [vmem:[%s17] sm:$0x1]
          %v2148 = vunpack.c.l.b16 %v2115
          %v2149 = vunpack.c.l.b16 %v2116
          %v2150 = vunpack.c.l.b16 %v2117
          %v2151 = vunpack.c.l.b16 %v2118
          %v2152 = vunpack.c.l.b16 %v2119
          %v2153 = vunpack.c.l.b16 %v2120
          %v2154 = vunpack.c.l.b16 %v2121
          %v2155 = vunpack.c.l.b16 %v2122
          %v2156 = vunpack.c.l.b16 %v2123
          %v2157 = vunpack.c.l.b16 %v2124
          %v2158 = vunpack.c.l.b16 %v2125
          %v2159 = vunpack.c.l.b16 %v2126
          %v2160 = vunpack.c.l.b16 %v2127
          %v2161 = vunpack.c.l.b16 %v2128
          %v2162 = vunpack.c.l.b16 %v2129
          %v2163 = vunpack.c.l.b16 %v2130
          %v2164 = vpack.c.b16 %v2149, %v2148
          %v2165 = vpack.c.b16 %v2151, %v2150
          %v2166 = vpack.c.b16 %v2153, %v2152
          %v2167 = vpack.c.b16 %v2155, %v2154
          %v2168 = vpack.c.b16 %v2157, %v2156
          %v2169 = vpack.c.b16 %v2159, %v2158
          %v2170 = vpack.c.b16 %v2161, %v2160
          %v2171 = vpack.c.b16 %v2163, %v2162
          %2180 = vmatpush.bf16.msra.mxu0 %v2171
          %2181 = vmatpush.bf16.msra.mxu0 %v2170
          %2182 = vmatpush.bf16.msra.mxu0 %v2169
          %2183 = vmatpush.bf16.msra.mxu0 %v2168
          %2184 = vmatpush.bf16.msra.mxu0 %v2167
          %2185 = vmatpush.bf16.msra.mxu0 %v2166
          %2186 = vmatpush.bf16.msra.mxu0 %v2165
          %2187 = vmatpush.bf16.msra.mxu0 %v2164
          %2188 = vmatmul.bf16.gmra.mxu0 %v2114
          %v2189 = vpop.f32.mrf.mxu0
          %v2190 = vadd.f32 %v2131, %v2189
          %v2191 = vpop.f32.mrf.mxu0
          %2192 = vdwg.mxu0
          %v2193 = vmax.f32 %v2190, 0.0
          %v2194 = vpack.c.bf16 %v2193, %v2193
          %v2195 = vld [vmem:[%s18] sm:$0xf]
          %v2196 = vld [vmem:[%s18 + $0x4] sm:$0xf]
          %v2197 = vld [vmem:[%s18 + $0x8] sm:$0xf]
          %v2198 = vld [vmem:[%s18 + $0xc] sm:$0xf]
          %v2199 = vld [vmem:[%s18 + $0x10] sm:$0xf]
          %v2200 = vld [vmem:[%s18 + $0x14] sm:$0xf]
          %v2201 = vld [vmem:[%s18 + $0x18] sm:$0xf]
          %v2202 = vld [vmem:[%s18 + $0x1c] sm:$0xf]
          %v2203 = vld [vmem:[%s18 + $0x20] sm:$0xf]
          %v2204 = vld [vmem:[%s18 + $0x24] sm:$0xf]
          %v2205 = vld [vmem:[%s18 + $0x28] sm:$0xf]
          %v2206 = vld [vmem:[%s18 + $0x2c] sm:$0xf]
          %v2207 = vld [vmem:[%s18 + $0x30] sm:$0xf]
          %v2208 = vld [vmem:[%s18 + $0x34] sm:$0xf]
          %v2209 = vld [vmem:[%s18 + $0x38] sm:$0xf]
          %v2210 = vld [vmem:[%s18 + $0x3c] sm:$0xf]
          %v2211 = vld [vmem:[%s19] sm:$0x1]
          %v2228 = vunpack.c.l.b16 %v2195
          %v2229 = vunpack.c.l.b16 %v2196
          %v2230 = vunpack.c.l.b16 %v2197
          %v2231 = vunpack.c.l.b16 %v2198
          %v2232 = vunpack.c.l.b16 %v2199
          %v2233 = vunpack.c.l.b16 %v2200
          %v2234 = vunpack.c.l.b16 %v2201
          %v2235 = vunpack.c.l.b16 %v2202
          %v2236 = vunpack.c.l.b16 %v2203
          %v2237 = vunpack.c.l.b16 %v2204
          %v2238 = vunpack.c.l.b16 %v2205
          %v2239 = vunpack.c.l.b16 %v2206
          %v2240 = vunpack.c.l.b16 %v2207
          %v2241 = vunpack.c.l.b16 %v2208
          %v2242 = vunpack.c.l.b16 %v2209
          %v2243 = vunpack.c.l.b16 %v2210
          %v2244 = vpack.c.b16 %v2229, %v2228
          %v2245 = vpack.c.b16 %v2231, %v2230
          %v2246 = vpack.c.b16 %v2233, %v2232
          %v2247 = vpack.c.b16 %v2235, %v2234
          %v2248 = vpack.c.b16 %v2237, %v2236
          %v2249 = vpack.c.b16 %v2239, %v2238
          %v2250 = vpack.c.b16 %v2241, %v2240
          %v2251 = vpack.c.b16 %v2243, %v2242
          %2260 = vmatpush.bf16.msra.mxu0 %v2251
          %2261 = vmatpush.bf16.msra.mxu0 %v2250
          %2262 = vmatpush.bf16.msra.mxu0 %v2249
          %2263 = vmatpush.bf16.msra.mxu0 %v2248
          %2264 = vmatpush.bf16.msra.mxu0 %v2247
          %2265 = vmatpush.bf16.msra.mxu0 %v2246
          %2266 = vmatpush.bf16.msra.mxu0 %v2245
          %2267 = vmatpush.bf16.msra.mxu0 %v2244
          %2268 = vmatmul.bf16.gmra.mxu0 %v2194
          %v2269 = vpop.f32.mrf.mxu0
          %v2270 = vadd.f32 %v2211, %v2269
          %v2271 = vpop.f32.mrf.mxu0
          %2272 = vdwg.mxu0
          %vm2273 = vcmask 24576
          %2274 = vst.msk [vmem:[%s916] sm:$0x1] %vm2273, %v2270
          %v2275 = vld [vmem:[%s968] sm:$0x1]
          %v2276 = vmax.f32 %v2270, 0.0
          %v2277 = vmul.f32 %v2270, %v2275
          %v2278 = vsub.f32 %v2276, %v2277
          %v2279 = vand.u32 2147483647, %v2270
          %v2280 = vsub.f32 0.0, %v2279
          %v2281 = vmul.f32 %v2280, 1.442695
          %v2282 = vpow.pop %v2281
          %v2283 = vadd.f32 %v2282, 1.0
          %v2284 = vlog2.pop %v2283
          %v2285 = vmul.f32 %v2284, 0.6931472
          %v2286 = vmul.f32 -0.5, %v2282
          %v2287 = vadd.f32 %v2286, 1.0
          %v2288 = vmul.f32 %v2287, %v2282
          %v2289 = vand.u32 2147483647, %v2282
          %vm2290 = vcmp.lt.f32.partialorder %v2289, 0.0004427343
          %v2291 = vsel %vm2290, %v2288, %v2285
          %v2292 = vadd.f32 %v2278, %v2291
          %v2293 = vsel %vm2273, %v2292, 0.0
          %2294 = vadd.xlane.f32.xlu0 %v2293
          %v2295 = vpop.xlane.xlu0 %2294
          %v2296 = vrot.slane %v2295, 4
          %v2297 = vadd.f32 %v2295, %v2296
          %v2298 = vrot.slane %v2297, 2
          %v2299 = vadd.f32 %v2297, %v2298
          %v2300 = vrot.slane %v2299, 1
          %v2301 = vadd.f32 %v2299, %v2300
          %s2302 = vtos %v2301
          %v2303 = vstv %s2302
          %vm2304 = vcmask 0
          %2305 = vst.msk [vmem:[%s971] sm:$0x1] %vm2304, %v2303
        $region120: #{text_model_forward.1} parent=103 // pred_fallthru
          _
        %s2306 = sand.u32 %s579, 1
        %s2307 = scalar_lea.sflag [#allocation6], %s2306
        %s2308 = sand.u32 %s579, 1
        %s2309 = scalar_lea.vmem [#allocation9], %s2308
        %p2310 = scmp.lt.s32.totalorder %s47, 1
        %s2311 = scalar_select %p2310, %s47, 1
        %s2312 = scalar_lea.vmem %s22, %s2311
        // Predicated region
        $region121: #{text_model_forward.1} parent=103 // pred_check
          %p2313 = pneg %p589
        $region122: #{text_model_forward.1} parent=103 // pred_check_branch
          %2315 = sbr.rel (%p2313) target = $region124
        $region123: #{text_model_forward.1} parent=103 // pred_region
          %2317 = vsyncadd %s2307, 0
          %s2318 = scalar_lea.hbm %s21, %s47
          %s2320 = sshll.u32 %s2309, 4
          %s2321 = int_to_ptr.vmem [resolvable:$true] %s2320
          %s2322 = sshll.u32 %s2318, 4
          %s2323 = int_to_ptr.hbm [resolvable:$true] %s2322
          %2325 = dma.vmem_to_hbm [thread:$0]  %s2321, 16, %s2323, %s2307
        $region124: #{text_model_forward.1} parent=103 // pred_fallthru
          _
        // Predicated region
        $region125: #{text_model_forward.1} parent=103 // pred_check
          %p2326 = pneg %p615
        $region126: #{text_model_forward.1} parent=103 // pred_check_branch
          %2328 = sbr.rel (%p2326) target = $region128
        $region127: #{text_model_forward.1} parent=103 // pred_region
          _
        $region128: #{text_model_forward.1} parent=103 // pred_fallthru
          _
      $region104: #{text_model_forward.1} parent=5 // pred_fallthru
        _
      %p2329 = scmp.le.s32.totalorder 2, %s38
      // Predicated region
      $region129: #{text_model_forward.1} parent=5 // pred_check
        %p2330 = pneg %p2329
      $region130: #{text_model_forward.1} parent=5 // pred_check_branch
        %2332 = sbr.rel (%p2330) target = $region132
      $region131: #{text_model_forward.1} parent=5 // pred_region
        %s2333 = ssub.s32 %s38, 2
        // Predicated region
        $region133: #{text_model_forward.1} parent=131 // pred_check
          %p2334 = pneg %p595
        $region134: #{text_model_forward.1} parent=131 // pred_check_branch
          %2336 = sbr.rel (%p2334) target = $region136
        $region135: #{text_model_forward.1} parent=131 // pred_region
          %s2337 = sand.u32 %s580, 1
          %s2338 = scalar_lea.sflag [#allocation6], %s2337
          %s2339 = sand.u32 %s580, 1
          %s2340 = scalar_lea.vmem [#allocation9], %s2339
          %2342 = dma.done %s2338, 16
        $region136: #{text_model_forward.1} parent=131 // pred_fallthru
          _
        // Predicated region
        $region137: #{text_model_forward.1} parent=131 // pred_check
          %p2343 = pneg %p621
        $region138: #{text_model_forward.1} parent=131 // pred_check_branch
          %2345 = sbr.rel (%p2343) target = $region140
        $region139: #{text_model_forward.1} parent=131 // pred_region
          %p2346 = scmp.lt.s32.totalorder %s49, 1
          %s2347 = scalar_select %p2346, %s49, 1
          %s2348 = scalar_lea.vmem %s22, %s2347
        $region140: #{text_model_forward.1} parent=131 // pred_fallthru
          _
      $region132: #{text_model_forward.1} parent=5 // pred_fallthru
        _
    $region6: #{text_model_forward.1} parent=1 // loop_footer
      %s42 = sadd.s32 1, %s38
    $region7: #{text_model_forward.1} parent=1 // loop_footer_branch
      %37 = sbr.rel target = $region3
    $region8: #{text_model_forward.1} parent=1 // loop_exit
      _
    %2349 = vsyncpa [#allocation5], 1
    %s2350 = scalar_lea.sflag [#allocation5], 1
    %2351 = vsyncpa %s2350, 1
    %2352 = vsyncpa [#allocation8], 1
    %s2353 = scalar_lea.sflag [#allocation8], 1
    %2354 = vsyncpa %s2353, 1
    %2355 = vsyncpa [#allocation6], 1
    %s2356 = scalar_lea.sflag [#allocation6], 1
    %2357 = vsyncpa %s2356, 1

</llo_original>
